<compile_context>
chip_gen: v6e
topology: v6e:2x2x1
jax: 0.10.0
libtpu: 0.0.40
codegen_flags: <defaults>
</compile_context>

<pallas_src>
import functools

import jax
import jax.numpy as jnp
from jax import lax
from jax.experimental import pallas as pl
from jax.experimental.pallas import tpu as pltpu

BN_EPS = 1e-5
_TM_MAX = 1024                      # max batch-tile rows (multiple of 256)
_LANE = 128
_VMEM_LIMIT = 32 * 1024 * 1024      # explicit scoped-VMEM cap (fits all gens)


def _round_up(a, b):
    return (a + b - 1) // b * b


def _stage_kernel(*refs, pre_bn_relu, emit_stats, sigmoid, tm, mask_upto):
    """One fused stage: [folded-BN + ReLU] -> Linear -> [partial stats | sigmoid]."""
    if pre_bn_relu:
        x_ref, scale_ref, shift_ref, w_ref, b_ref = refs[:5]
        out_refs = refs[5:]
    else:
        x_ref, w_ref, b_ref = refs[:3]
        out_refs = refs[3:]
    z_ref = out_refs[0]

    h = x_ref[...]
    if pre_bn_relu:
        # BatchNorm folded to a per-feature scale/shift (whole-batch stats of
        # the previous stage, precomputed outside the kernel), then ReLU.
        h = jnp.maximum(h * scale_ref[...] + shift_ref[...], 0.0)

    z = jnp.dot(h, w_ref[...], preferred_element_type=jnp.float32) + b_ref[...]

    if sigmoid:
        # sigmoid(z) = 0.5*tanh(z/2)+0.5 -> tanh runs on the EUP slot,
        # avoiding an f32 divide on the VALU.
        z = 0.5 * jnp.tanh(0.5 * z) + 0.5

    z_ref[...] = z

    if emit_stats:
        stats_ref = out_refs[1]
        zz = z
        if mask_upto is not None:
            # Rows >= mask_upto are batch padding; exclude them from the stats.
            row = pl.program_id(0) * tm + lax.broadcasted_iota(
                jnp.int32, (tm, 1), 0)
            zz = jnp.where(row < mask_upto, z, 0.0)
        # Per-tile partial sums (row 0) and sums-of-squares (row 1); the
        # wrapper reduces across tiles.  Keeping partials per tile (instead of
        # an in-kernel accumulator) lets the batch axis stay "parallel".
        stats_ref[0:1, :] = jnp.sum(zz, axis=0, keepdims=True)
        stats_ref[1:2, :] = jnp.sum(zz * zz, axis=0, keepdims=True)


def _run_stage(x, scale, shift, w, b, *, tm, n_valid, emit_stats, sigmoid):
    b_pad, f_in = x.shape
    f_out = w.shape[1]
    n_t = b_pad // tm
    pre = scale is not None

    x_spec = pl.BlockSpec((tm, f_in), lambda i: (i, 0))
    vec_in = pl.BlockSpec((1, f_in), lambda i: (0, 0))
    w_spec = pl.BlockSpec((f_in, f_out), lambda i: (0, 0))    # resident weights
    vec_out = pl.BlockSpec((1, f_out), lambda i: (0, 0))
    z_spec = pl.BlockSpec((tm, f_out), lambda i: (i, 0))
    st_spec = pl.BlockSpec((8, f_out), lambda i: (i, 0))

    if pre:
        inputs = (x, scale, shift, w, b)
        in_specs = [x_spec, vec_in, vec_in, w_spec, vec_out]
    else:
        inputs = (x, w, b)
        in_specs = [x_spec, w_spec, vec_out]

    if emit_stats:
        out_shape = (jax.ShapeDtypeStruct((b_pad, f_out), jnp.float32),
                     jax.ShapeDtypeStruct((8 * n_t, f_out), jnp.float32))
        out_specs = (z_spec, st_spec)
    else:
        out_shape = jax.ShapeDtypeStruct((b_pad, f_out), jnp.float32)
        out_specs = z_spec

    kernel = functools.partial(
        _stage_kernel,
        pre_bn_relu=pre,
        emit_stats=emit_stats,
        sigmoid=sigmoid,
        tm=tm,
        mask_upto=None if n_valid == b_pad else n_valid,
    )

    return pl.pallas_call(
        kernel,
        grid=(n_t,),
        in_specs=in_specs,
        out_specs=out_specs,
        out_shape=out_shape,
        compiler_params=pltpu.CompilerParams(
            dimension_semantics=("parallel",),
            vmem_limit_bytes=_VMEM_LIMIT,
        ),
    )(*inputs)


def _fold_bn(stats, gamma, beta, n_valid, n_tiles):
    """Reduce per-tile partial stats and fold BN into a [1,F] scale/shift."""
    f = stats.shape[-1]
    st = stats.reshape(n_tiles, 8, f)
    ssum = jnp.sum(st[:, 0, :], axis=0)
    ssq = jnp.sum(st[:, 1, :], axis=0)
    mean = ssum / n_valid
    var = jnp.maximum(ssq / n_valid - mean * mean, 0.0)   # biased batch var
    scale = gamma * lax.rsqrt(var + BN_EPS)
    shift = beta - mean * scale
    return scale, shift


@functools.partial(jax.jit, static_argnames=("output_size",))
def regressor_forward(x, params, output_size):
    (w1, b1, g1, be1, w2, b2, g2, be2, w3, b3, g3, be3, w4, b4) = params

    B = x.shape[0]
    tm = min(_TM_MAX, _round_up(max(B, 8), 8))
    b_pad = _round_up(B, tm)
    n_t = b_pad // tm

    xp = x.astype(jnp.float32)
    if b_pad != B:
        xp = jnp.pad(xp, ((0, b_pad - B), (0, 0)))

    # Pad fc4's output features to a lane-dense multiple of 128 (sliced below).
    out_pad = _round_up(output_size, _LANE)
    w4p = jnp.pad(w4, ((0, 0), (0, out_pad - output_size)))
    b4p = jnp.pad(b4, ((0, 0), (0, out_pad - output_size)))

    z1, st1 = _run_stage(xp, None, None, w1, b1, tm=tm, n_valid=B,
                         emit_stats=True, sigmoid=False)
    s1, sh1 = _fold_bn(st1, g1, be1, B, n_t)

    z2, st2 = _run_stage(z1, s1, sh1, w2, b2, tm=tm, n_valid=B,
                         emit_stats=True, sigmoid=False)
    s2, sh2 = _fold_bn(st2, g2, be2, B, n_t)

    z3, st3 = _run_stage(z2, s2, sh2, w3, b3, tm=tm, n_valid=B,
                         emit_stats=True, sigmoid=False)
    s3, sh3 = _fold_bn(st3, g3, be3, B, n_t)

    y = _run_stage(z3, s3, sh3, w4p, b4p, tm=tm, n_valid=B,
                   emit_stats=False, sigmoid=True)
    return y[:B, :output_size]


def init_params(key, input_size, output_size):
    """Deterministic init. Linear weights stored as [in, out]; biases/BN as [1, F]."""
    dims = [(input_size, 512), (512, 256), (256, 128), (128, output_size)]
    params = []
    keys = jax.random.split(key, len(dims) * 2)
    for i, (fan_in, fan_out) in enumerate(dims):
        bound = 1.0 / jnp.sqrt(fan_in)
        w = jax.random.uniform(
            keys[2 * i], (fan_in, fan_out), jnp.float32, -bound, bound)
        b = jax.random.uniform(
            keys[2 * i + 1], (1, fan_out), jnp.float32, -bound, bound)
        params.append(w)
        params.append(b)
        if i < 3:  # BatchNorm affine params (gamma=1, beta=0 as in PyTorch init)
            params.append(jnp.ones((1, fan_out), jnp.float32))
            params.append(jnp.zeros((1, fan_out), jnp.float32))
    return tuple(params)


def reference_forward(x, params):
    """Pure-JAX reference matching the PyTorch forward (training-mode BN)."""
    (w1, b1, g1, be1, w2, b2, g2, be2, w3, b3, g3, be3, w4, b4) = params

    def bn_relu(h, g, be):
        mu = jnp.mean(h, axis=0, keepdims=True)
        var = jnp.mean((h - mu) ** 2, axis=0, keepdims=True)
        return jnp.maximum((h - mu) / jnp.sqrt(var + BN_EPS) * g + be, 0.0)

    h = bn_relu(x @ w1 + b1, g1, be1)
    h = bn_relu(h @ w2 + b2, g2, be2)
    h = bn_relu(h @ w3 + b3, g3, be3)
    return jax.nn.sigmoid(h @ w4 + b4)


if __name__ == "__main__":
    INPUT_SIZE = 32
    OUTPUT_SIZE = 4

    key = jax.random.PRNGKey(0)
    k_x1, k_x2, k_p = jax.random.split(key, 3)
    params = init_params(k_p, INPUT_SIZE, OUTPUT_SIZE)

    # Small case (single batch tile).
    x_small = jax.random.normal(k_x1, (8, INPUT_SIZE), jnp.float32)
    out_small = jax.block_until_ready(
        regressor_forward(x_small, params, OUTPUT_SIZE))
    ref_small = reference_forward(x_small, params)
    assert out_small.shape == (8, OUTPUT_SIZE), out_small.shape
    assert jnp.allclose(out_small, ref_small, atol=1e-4, rtol=1e-4), float(
        jnp.max(jnp.abs(out_small - ref_small)))

    # Larger, non-tile-aligned case: exercises the batch grid, resident weights,
    # cross-tile BatchNorm statistics and padded-row masking.
    x_big = jax.random.normal(k_x2, (1500, INPUT_SIZE), jnp.float32)
    out_big = jax.block_until_ready(
        regressor_forward(x_big, params, OUTPUT_SIZE))
    ref_big = reference_forward(x_big, params)
    assert out_big.shape == (1500, OUTPUT_SIZE), out_big.shape
    assert jnp.allclose(out_big, ref_big, atol=1e-4, rtol=1e-4), float(
        jnp.max(jnp.abs(out_big - ref_big)))

    print("KERNEL_OK")
</pallas_src>

<mosaic_0001>
module attributes {stable_mosaic.version = 11 : i64} {
  func.func @_stage_kernel(%arg0: i32, %arg1: memref<8x32xf32, #tpu.memory_space<vmem>>, %arg2: memref<32x512xf32, #tpu.memory_space<vmem>>, %arg3: memref<1x512xf32, #tpu.memory_space<vmem>>, %arg4: memref<8x512xf32, #tpu.memory_space<vmem>>, %arg5: memref<8x512xf32, #tpu.memory_space<vmem>>) attributes {dimension_semantics = [#tpu.dimension_semantics<parallel>], iteration_bounds = array<i64: 1>, scalar_prefetch = 0 : i64, scratch_operands = 0 : i64, tpu.core_type = #tpu.core_type<tc>, window_params = [{transform_indices = @transform_0, window_bounds = array<i64: 8, 32>}, {pipeline_mode = #tpu.pipeline_mode<synchronous>, transform_indices = @transform_1, window_bounds = array<i64: 32, 512>}, {pipeline_mode = #tpu.pipeline_mode<synchronous>, transform_indices = @transform_2, window_bounds = array<i64: 1, 512>}, {transform_indices = @transform_3, window_bounds = array<i64: 8, 512>}, {transform_indices = @transform_4, window_bounds = array<i64: 8, 512>}]} {
    %c0 = arith.constant 0 : index
    %c0_0 = arith.constant 0 : index
    %0 = vector.load %arg1[%c0, %c0_0] : memref<8x32xf32, #tpu.memory_space<vmem>>, vector<8x32xf32>
    %c0_1 = arith.constant 0 : index
    %c0_2 = arith.constant 0 : index
    %1 = vector.load %arg2[%c0_1, %c0_2] : memref<32x512xf32, #tpu.memory_space<vmem>>, vector<32x512xf32>
    %cst = arith.constant dense<0.000000e+00> : vector<8x512xf32>
    %2 = tpu.matmul %0, %1, %cst {dimension_numbers = #tpu.dot_dimension_numbers<[1], [0], [0], [1], [0, 0, 1, 1], [], []>} : vector<8x32xf32>, vector<32x512xf32>, vector<8x512xf32> -> vector<8x512xf32>
    %c0_3 = arith.constant 0 : index
    %c0_4 = arith.constant 0 : index
    %3 = vector.load %arg3[%c0_3, %c0_4] : memref<1x512xf32, #tpu.memory_space<vmem>>, vector<1x512xf32>
    %4 = vector.broadcast %3 : vector<1x512xf32> to vector<8x512xf32>
    %5 = arith.addf %2, %4 : vector<8x512xf32>
    %c0_5 = arith.constant 0 : index
    %c0_6 = arith.constant 0 : index
    %6 = vector.load %arg4[%c0_5, %c0_6] : memref<8x512xf32, #tpu.memory_space<vmem>>, vector<8x512xf32>
    tpu.vector_store %arg4[%c0_5, %c0_6], %5 {strides = array<i32>} : memref<8x512xf32, #tpu.memory_space<vmem>>, vector<8x512xf32>,
    %cst_7 = arith.constant dense<0.000000e+00> : vector<512xf32>
    %7 = vector.multi_reduction <add>, %5, %cst_7 [0] : vector<8x512xf32> to vector<512xf32>
    %8 = vector.shape_cast %7 : vector<512xf32> to vector<1x512xf32>
    %c0_8 = arith.constant 0 : index
    %c0_9 = arith.constant 0 : index
    %9 = vector.load %arg5[%c0_8, %c0_9] : memref<8x512xf32, #tpu.memory_space<vmem>>, vector<1x512xf32>
    tpu.vector_store %arg5[%c0_8, %c0_9], %8 {strides = array<i32>} : memref<8x512xf32, #tpu.memory_space<vmem>>, vector<1x512xf32>,
    %10 = arith.mulf %5, %5 : vector<8x512xf32>
    %cst_10 = arith.constant dense<0.000000e+00> : vector<512xf32>
    %11 = vector.multi_reduction <add>, %10, %cst_10 [0] : vector<8x512xf32> to vector<512xf32>
    %12 = vector.shape_cast %11 : vector<512xf32> to vector<1x512xf32>
    %c1 = arith.constant 1 : index
    %c0_11 = arith.constant 0 : index
    %13 = vector.load %arg5[%c1, %c0_11] : memref<8x512xf32, #tpu.memory_space<vmem>>, vector<1x512xf32>
    tpu.vector_store %arg5[%c1, %c0_11], %12 {strides = array<i32>} : memref<8x512xf32, #tpu.memory_space<vmem>>, vector<1x512xf32>,
    return
  }
  func.func @transform_0(%arg0: i32) -> (i32, i32) {
    %c0_i32 = arith.constant 0 : i32
    %c0_i32_0 = arith.constant 0 : i32
    return %arg0, %c0_i32 : i32, i32
  }
  func.func @transform_1(%arg0: i32) -> (i32, i32) {
    %c0_i32 = arith.constant 0 : i32
    %c0_i32_0 = arith.constant 0 : i32
    %c0_i32_1 = arith.constant 0 : i32
    return %c0_i32, %c0_i32_0 : i32, i32
  }
  func.func @transform_2(%arg0: i32) -> (i32, i32) {
    %c0_i32 = arith.constant 0 : i32
    %c0_i32_0 = arith.constant 0 : i32
    %c0_i32_1 = arith.constant 0 : i32
    return %c0_i32, %c0_i32_0 : i32, i32
  }
  func.func @transform_3(%arg0: i32) -> (i32, i32) {
    %c0_i32 = arith.constant 0 : i32
    %c0_i32_0 = arith.constant 0 : i32
    return %arg0, %c0_i32 : i32, i32
  }
  func.func @transform_4(%arg0: i32) -> (i32, i32) {
    %c0_i32 = arith.constant 0 : i32
    %c0_i32_0 = arith.constant 0 : i32
    return %arg0, %c0_i32 : i32, i32
  }
}

module attributes {stable_mosaic.version = 11 : i64} {
  func.func @_stage_kernel(%arg0: i32, %arg1: memref<8x512xf32, #tpu.memory_space<vmem>>, %arg2: memref<1x512xf32, #tpu.memory_space<vmem>>, %arg3: memref<1x512xf32, #tpu.memory_space<vmem>>, %arg4: memref<512x256xf32, #tpu.memory_space<vmem>>, %arg5: memref<1x256xf32, #tpu.memory_space<vmem>>, %arg6: memref<8x256xf32, #tpu.memory_space<vmem>>, %arg7: memref<8x256xf32, #tpu.memory_space<vmem>>) attributes {dimension_semantics = [#tpu.dimension_semantics<parallel>], iteration_bounds = array<i64: 1>, scalar_prefetch = 0 : i64, scratch_operands = 0 : i64, tpu.core_type = #tpu.core_type<tc>, window_params = [{transform_indices = @transform_0, window_bounds = array<i64: 8, 512>}, {pipeline_mode = #tpu.pipeline_mode<synchronous>, transform_indices = @transform_1, window_bounds = array<i64: 1, 512>}, {pipeline_mode = #tpu.pipeline_mode<synchronous>, transform_indices = @transform_2, window_bounds = array<i64: 1, 512>}, {pipeline_mode = #tpu.pipeline_mode<synchronous>, transform_indices = @transform_3, window_bounds = array<i64: 512, 256>}, {pipeline_mode = #tpu.pipeline_mode<synchronous>, transform_indices = @transform_4, window_bounds = array<i64: 1, 256>}, {transform_indices = @transform_5, window_bounds = array<i64: 8, 256>}, {transform_indices = @transform_6, window_bounds = array<i64: 8, 256>}]} {
    %c0 = arith.constant 0 : index
    %c0_0 = arith.constant 0 : index
    %0 = vector.load %arg1[%c0, %c0_0] : memref<8x512xf32, #tpu.memory_space<vmem>>, vector<8x512xf32>
    %c0_1 = arith.constant 0 : index
    %c0_2 = arith.constant 0 : index
    %1 = vector.load %arg2[%c0_1, %c0_2] : memref<1x512xf32, #tpu.memory_space<vmem>>, vector<1x512xf32>
    %2 = vector.broadcast %1 : vector<1x512xf32> to vector<8x512xf32>
    %3 = arith.mulf %0, %2 : vector<8x512xf32>
    %c0_3 = arith.constant 0 : index
    %c0_4 = arith.constant 0 : index
    %4 = vector.load %arg3[%c0_3, %c0_4] : memref<1x512xf32, #tpu.memory_space<vmem>>, vector<1x512xf32>
    %5 = vector.broadcast %4 : vector<1x512xf32> to vector<8x512xf32>
    %6 = arith.addf %3, %5 : vector<8x512xf32>
    %cst = arith.constant 0.000000e+00 : f32
    %7 = vector.broadcast %cst : f32 to vector<8x512xf32>
    %8 = arith.maximumf %6, %7 : vector<8x512xf32>
    %c0_5 = arith.constant 0 : index
    %c0_6 = arith.constant 0 : index
    %9 = vector.load %arg4[%c0_5, %c0_6] : memref<512x256xf32, #tpu.memory_space<vmem>>, vector<512x256xf32>
    %cst_7 = arith.constant dense<0.000000e+00> : vector<8x256xf32>
    %10 = tpu.matmul %8, %9, %cst_7 {dimension_numbers = #tpu.dot_dimension_numbers<[1], [0], [0], [1], [0, 0, 1, 1], [], []>} : vector<8x512xf32>, vector<512x256xf32>, vector<8x256xf32> -> vector<8x256xf32>
    %c0_8 = arith.constant 0 : index
    %c0_9 = arith.constant 0 : index
    %11 = vector.load %arg5[%c0_8, %c0_9] : memref<1x256xf32, #tpu.memory_space<vmem>>, vector<1x256xf32>
    %12 = vector.broadcast %11 : vector<1x256xf32> to vector<8x256xf32>
    %13 = arith.addf %10, %12 : vector<8x256xf32>
    %c0_10 = arith.constant 0 : index
    %c0_11 = arith.constant 0 : index
    %14 = vector.load %arg6[%c0_10, %c0_11] : memref<8x256xf32, #tpu.memory_space<vmem>>, vector<8x256xf32>
    tpu.vector_store %arg6[%c0_10, %c0_11], %13 {strides = array<i32>} : memref<8x256xf32, #tpu.memory_space<vmem>>, vector<8x256xf32>,
    %cst_12 = arith.constant dense<0.000000e+00> : vector<256xf32>
    %15 = vector.multi_reduction <add>, %13, %cst_12 [0] : vector<8x256xf32> to vector<256xf32>
    %16 = vector.shape_cast %15 : vector<256xf32> to vector<1x256xf32>
    %c0_13 = arith.constant 0 : index
    %c0_14 = arith.constant 0 : index
    %17 = vector.load %arg7[%c0_13, %c0_14] : memref<8x256xf32, #tpu.memory_space<vmem>>, vector<1x256xf32>
    tpu.vector_store %arg7[%c0_13, %c0_14], %16 {strides = array<i32>} : memref<8x256xf32, #tpu.memory_space<vmem>>, vector<1x256xf32>,
    %18 = arith.mulf %13, %13 : vector<8x256xf32>
    %cst_15 = arith.constant dense<0.000000e+00> : vector<256xf32>
    %19 = vector.multi_reduction <add>, %18, %cst_15 [0] : vector<8x256xf32> to vector<256xf32>
    %20 = vector.shape_cast %19 : vector<256xf32> to vector<1x256xf32>
    %c1 = arith.constant 1 : index
    %c0_16 = arith.constant 0 : index
    %21 = vector.load %arg7[%c1, %c0_16] : memref<8x256xf32, #tpu.memory_space<vmem>>, vector<1x256xf32>
    tpu.vector_store %arg7[%c1, %c0_16], %20 {strides = array<i32>} : memref<8x256xf32, #tpu.memory_space<vmem>>, vector<1x256xf32>,
    return
  }
  func.func @transform_0(%arg0: i32) -> (i32, i32) {
    %c0_i32 = arith.constant 0 : i32
    %c0_i32_0 = arith.constant 0 : i32
    return %arg0, %c0_i32 : i32, i32
  }
  func.func @transform_1(%arg0: i32) -> (i32, i32) {
    %c0_i32 = arith.constant 0 : i32
    %c0_i32_0 = arith.constant 0 : i32
    %c0_i32_1 = arith.constant 0 : i32
    return %c0_i32, %c0_i32_0 : i32, i32
  }
  func.func @transform_2(%arg0: i32) -> (i32, i32) {
    %c0_i32 = arith.constant 0 : i32
    %c0_i32_0 = arith.constant 0 : i32
    %c0_i32_1 = arith.constant 0 : i32
    return %c0_i32, %c0_i32_0 : i32, i32
  }
  func.func @transform_3(%arg0: i32) -> (i32, i32) {
    %c0_i32 = arith.constant 0 : i32
    %c0_i32_0 = arith.constant 0 : i32
    %c0_i32_1 = arith.constant 0 : i32
    return %c0_i32, %c0_i32_0 : i32, i32
  }
  func.func @transform_4(%arg0: i32) -> (i32, i32) {
    %c0_i32 = arith.constant 0 : i32
    %c0_i32_0 = arith.constant 0 : i32
    %c0_i32_1 = arith.constant 0 : i32
    return %c0_i32, %c0_i32_0 : i32, i32
  }
  func.func @transform_5(%arg0: i32) -> (i32, i32) {
    %c0_i32 = arith.constant 0 : i32
    %c0_i32_0 = arith.constant 0 : i32
    return %arg0, %c0_i32 : i32, i32
  }
  func.func @transform_6(%arg0: i32) -> (i32, i32) {
    %c0_i32 = arith.constant 0 : i32
    %c0_i32_0 = arith.constant 0 : i32
    return %arg0, %c0_i32 : i32, i32
  }
}

module attributes {stable_mosaic.version = 11 : i64} {
  func.func @_stage_kernel(%arg0: i32, %arg1: memref<8x256xf32, #tpu.memory_space<vmem>>, %arg2: memref<1x256xf32, #tpu.memory_space<vmem>>, %arg3: memref<1x256xf32, #tpu.memory_space<vmem>>, %arg4: memref<256x128xf32, #tpu.memory_space<vmem>>, %arg5: memref<1x128xf32, #tpu.memory_space<vmem>>, %arg6: memref<8x128xf32, #tpu.memory_space<vmem>>, %arg7: memref<8x128xf32, #tpu.memory_space<vmem>>) attributes {dimension_semantics = [#tpu.dimension_semantics<parallel>], iteration_bounds = array<i64: 1>, scalar_prefetch = 0 : i64, scratch_operands = 0 : i64, tpu.core_type = #tpu.core_type<tc>, window_params = [{transform_indices = @transform_0, window_bounds = array<i64: 8, 256>}, {pipeline_mode = #tpu.pipeline_mode<synchronous>, transform_indices = @transform_1, window_bounds = array<i64: 1, 256>}, {pipeline_mode = #tpu.pipeline_mode<synchronous>, transform_indices = @transform_2, window_bounds = array<i64: 1, 256>}, {pipeline_mode = #tpu.pipeline_mode<synchronous>, transform_indices = @transform_3, window_bounds = array<i64: 256, 128>}, {pipeline_mode = #tpu.pipeline_mode<synchronous>, transform_indices = @transform_4, window_bounds = array<i64: 1, 128>}, {transform_indices = @transform_5, window_bounds = array<i64: 8, 128>}, {transform_indices = @transform_6, window_bounds = array<i64: 8, 128>}]} {
    %c0 = arith.constant 0 : index
    %c0_0 = arith.constant 0 : index
    %0 = vector.load %arg1[%c0, %c0_0] : memref<8x256xf32, #tpu.memory_space<vmem>>, vector<8x256xf32>
    %c0_1 = arith.constant 0 : index
    %c0_2 = arith.constant 0 : index
    %1 = vector.load %arg2[%c0_1, %c0_2] : memref<1x256xf32, #tpu.memory_space<vmem>>, vector<1x256xf32>
    %2 = vector.broadcast %1 : vector<1x256xf32> to vector<8x256xf32>
    %3 = arith.mulf %0, %2 : vector<8x256xf32>
    %c0_3 = arith.constant 0 : index
    %c0_4 = arith.constant 0 : index
    %4 = vector.load %arg3[%c0_3, %c0_4] : memref<1x256xf32, #tpu.memory_space<vmem>>, vector<1x256xf32>
    %5 = vector.broadcast %4 : vector<1x256xf32> to vector<8x256xf32>
    %6 = arith.addf %3, %5 : vector<8x256xf32>
    %cst = arith.constant 0.000000e+00 : f32
    %7 = vector.broadcast %cst : f32 to vector<8x256xf32>
    %8 = arith.maximumf %6, %7 : vector<8x256xf32>
    %c0_5 = arith.constant 0 : index
    %c0_6 = arith.constant 0 : index
    %9 = vector.load %arg4[%c0_5, %c0_6] : memref<256x128xf32, #tpu.memory_space<vmem>>, vector<256x128xf32>
    %cst_7 = arith.constant dense<0.000000e+00> : vector<8x128xf32>
    %10 = tpu.matmul %8, %9, %cst_7 {dimension_numbers = #tpu.dot_dimension_numbers<[1], [0], [0], [1], [0, 0, 1, 1], [], []>} : vector<8x256xf32>, vector<256x128xf32>, vector<8x128xf32> -> vector<8x128xf32>
    %c0_8 = arith.constant 0 : index
    %c0_9 = arith.constant 0 : index
    %11 = vector.load %arg5[%c0_8, %c0_9] : memref<1x128xf32, #tpu.memory_space<vmem>>, vector<1x128xf32>
    %12 = vector.broadcast %11 : vector<1x128xf32> to vector<8x128xf32>
    %13 = arith.addf %10, %12 : vector<8x128xf32>
    %c0_10 = arith.constant 0 : index
    %c0_11 = arith.constant 0 : index
    %14 = vector.load %arg6[%c0_10, %c0_11] : memref<8x128xf32, #tpu.memory_space<vmem>>, vector<8x128xf32>
    tpu.vector_store %arg6[%c0_10, %c0_11], %13 {strides = array<i32>} : memref<8x128xf32, #tpu.memory_space<vmem>>, vector<8x128xf32>,
    %cst_12 = arith.constant dense<0.000000e+00> : vector<128xf32>
    %15 = vector.multi_reduction <add>, %13, %cst_12 [0] : vector<8x128xf32> to vector<128xf32>
    %16 = vector.shape_cast %15 : vector<128xf32> to vector<1x128xf32>
    %c0_13 = arith.constant 0 : index
    %c0_14 = arith.constant 0 : index
    %17 = vector.load %arg7[%c0_13, %c0_14] : memref<8x128xf32, #tpu.memory_space<vmem>>, vector<1x128xf32>
    tpu.vector_store %arg7[%c0_13, %c0_14], %16 {strides = array<i32>} : memref<8x128xf32, #tpu.memory_space<vmem>>, vector<1x128xf32>,
    %18 = arith.mulf %13, %13 : vector<8x128xf32>
    %cst_15 = arith.constant dense<0.000000e+00> : vector<128xf32>
    %19 = vector.multi_reduction <add>, %18, %cst_15 [0] : vector<8x128xf32> to vector<128xf32>
    %20 = vector.shape_cast %19 : vector<128xf32> to vector<1x128xf32>
    %c1 = arith.constant 1 : index
    %c0_16 = arith.constant 0 : index
    %21 = vector.load %arg7[%c1, %c0_16] : memref<8x128xf32, #tpu.memory_space<vmem>>, vector<1x128xf32>
    tpu.vector_store %arg7[%c1, %c0_16], %20 {strides = array<i32>} : memref<8x128xf32, #tpu.memory_space<vmem>>, vector<1x128xf32>,
    return
  }
  func.func @transform_0(%arg0: i32) -> (i32, i32) {
    %c0_i32 = arith.constant 0 : i32
    %c0_i32_0 = arith.constant 0 : i32
    return %arg0, %c0_i32 : i32, i32
  }
  func.func @transform_1(%arg0: i32) -> (i32, i32) {
    %c0_i32 = arith.constant 0 : i32
    %c0_i32_0 = arith.constant 0 : i32
    %c0_i32_1 = arith.constant 0 : i32
    return %c0_i32, %c0_i32_0 : i32, i32
  }
  func.func @transform_2(%arg0: i32) -> (i32, i32) {
    %c0_i32 = arith.constant 0 : i32
    %c0_i32_0 = arith.constant 0 : i32
    %c0_i32_1 = arith.constant 0 : i32
    return %c0_i32, %c0_i32_0 : i32, i32
  }
  func.func @transform_3(%arg0: i32) -> (i32, i32) {
    %c0_i32 = arith.constant 0 : i32
    %c0_i32_0 = arith.constant 0 : i32
    %c0_i32_1 = arith.constant 0 : i32
    return %c0_i32, %c0_i32_0 : i32, i32
  }
  func.func @transform_4(%arg0: i32) -> (i32, i32) {
    %c0_i32 = arith.constant 0 : i32
    %c0_i32_0 = arith.constant 0 : i32
    %c0_i32_1 = arith.constant 0 : i32
    return %c0_i32, %c0_i32_0 : i32, i32
  }
  func.func @transform_5(%arg0: i32) -> (i32, i32) {
    %c0_i32 = arith.constant 0 : i32
    %c0_i32_0 = arith.constant 0 : i32
    return %arg0, %c0_i32 : i32, i32
  }
  func.func @transform_6(%arg0: i32) -> (i32, i32) {
    %c0_i32 = arith.constant 0 : i32
    %c0_i32_0 = arith.constant 0 : i32
    return %arg0, %c0_i32 : i32, i32
  }
}

module attributes {stable_mosaic.version = 11 : i64} {
  func.func @_stage_kernel(%arg0: i32, %arg1: memref<8x128xf32, #tpu.memory_space<vmem>>, %arg2: memref<1x128xf32, #tpu.memory_space<vmem>>, %arg3: memref<1x128xf32, #tpu.memory_space<vmem>>, %arg4: memref<128x128xf32, #tpu.memory_space<vmem>>, %arg5: memref<1x128xf32, #tpu.memory_space<vmem>>, %arg6: memref<8x128xf32, #tpu.memory_space<vmem>>) attributes {dimension_semantics = [#tpu.dimension_semantics<parallel>], iteration_bounds = array<i64: 1>, scalar_prefetch = 0 : i64, scratch_operands = 0 : i64, tpu.core_type = #tpu.core_type<tc>, window_params = [{transform_indices = @transform_0, window_bounds = array<i64: 8, 128>}, {pipeline_mode = #tpu.pipeline_mode<synchronous>, transform_indices = @transform_1, window_bounds = array<i64: 1, 128>}, {pipeline_mode = #tpu.pipeline_mode<synchronous>, transform_indices = @transform_2, window_bounds = array<i64: 1, 128>}, {pipeline_mode = #tpu.pipeline_mode<synchronous>, transform_indices = @transform_3, window_bounds = array<i64: 128, 128>}, {pipeline_mode = #tpu.pipeline_mode<synchronous>, transform_indices = @transform_4, window_bounds = array<i64: 1, 128>}, {transform_indices = @transform_5, window_bounds = array<i64: 8, 128>}]} {
    %c0 = arith.constant 0 : index
    %c0_0 = arith.constant 0 : index
    %0 = vector.load %arg1[%c0, %c0_0] : memref<8x128xf32, #tpu.memory_space<vmem>>, vector<8x128xf32>
    %c0_1 = arith.constant 0 : index
    %c0_2 = arith.constant 0 : index
    %1 = vector.load %arg2[%c0_1, %c0_2] : memref<1x128xf32, #tpu.memory_space<vmem>>, vector<1x128xf32>
    %2 = vector.broadcast %1 : vector<1x128xf32> to vector<8x128xf32>
    %3 = arith.mulf %0, %2 : vector<8x128xf32>
    %c0_3 = arith.constant 0 : index
    %c0_4 = arith.constant 0 : index
    %4 = vector.load %arg3[%c0_3, %c0_4] : memref<1x128xf32, #tpu.memory_space<vmem>>, vector<1x128xf32>
    %5 = vector.broadcast %4 : vector<1x128xf32> to vector<8x128xf32>
    %6 = arith.addf %3, %5 : vector<8x128xf32>
    %cst = arith.constant 0.000000e+00 : f32
    %7 = vector.broadcast %cst : f32 to vector<8x128xf32>
    %8 = arith.maximumf %6, %7 : vector<8x128xf32>
    %c0_5 = arith.constant 0 : index
    %c0_6 = arith.constant 0 : index
    %9 = vector.load %arg4[%c0_5, %c0_6] : memref<128x128xf32, #tpu.memory_space<vmem>>, vector<128x128xf32>
    %cst_7 = arith.constant dense<0.000000e+00> : vector<8x128xf32>
    %10 = tpu.matmul %8, %9, %cst_7 {dimension_numbers = #tpu.dot_dimension_numbers<[1], [0], [0], [1], [0, 0, 1, 1], [], []>} : vector<8x128xf32>, vector<128x128xf32>, vector<8x128xf32> -> vector<8x128xf32>
    %c0_8 = arith.constant 0 : index
    %c0_9 = arith.constant 0 : index
    %11 = vector.load %arg5[%c0_8, %c0_9] : memref<1x128xf32, #tpu.memory_space<vmem>>, vector<1x128xf32>
    %12 = vector.broadcast %11 : vector<1x128xf32> to vector<8x128xf32>
    %13 = arith.addf %10, %12 : vector<8x128xf32>
    %cst_10 = arith.constant 5.000000e-01 : f32
    %14 = vector.broadcast %cst_10 : f32 to vector<8x128xf32>
    %15 = arith.mulf %14, %13 : vector<8x128xf32>
    %16 = math.tanh %15 : vector<8x128xf32>
    %cst_11 = arith.constant 5.000000e-01 : f32
    %17 = vector.broadcast %cst_11 : f32 to vector<8x128xf32>
    %18 = arith.mulf %17, %16 : vector<8x128xf32>
    %cst_12 = arith.constant 5.000000e-01 : f32
    %19 = vector.broadcast %cst_12 : f32 to vector<8x128xf32>
    %20 = arith.addf %18, %19 : vector<8x128xf32>
    %c0_13 = arith.constant 0 : index
    %c0_14 = arith.constant 0 : index
    %21 = vector.load %arg6[%c0_13, %c0_14] : memref<8x128xf32, #tpu.memory_space<vmem>>, vector<8x128xf32>
    tpu.vector_store %arg6[%c0_13, %c0_14], %20 {strides = array<i32>} : memref<8x128xf32, #tpu.memory_space<vmem>>, vector<8x128xf32>,
    return
  }
  func.func @transform_0(%arg0: i32) -> (i32, i32) {
    %c0_i32 = arith.constant 0 : i32
    %c0_i32_0 = arith.constant 0 : i32
    return %arg0, %c0_i32 : i32, i32
  }
  func.func @transform_1(%arg0: i32) -> (i32, i32) {
    %c0_i32 = arith.constant 0 : i32
    %c0_i32_0 = arith.constant 0 : i32
    %c0_i32_1 = arith.constant 0 : i32
    return %c0_i32, %c0_i32_0 : i32, i32
  }
  func.func @transform_2(%arg0: i32) -> (i32, i32) {
    %c0_i32 = arith.constant 0 : i32
    %c0_i32_0 = arith.constant 0 : i32
    %c0_i32_1 = arith.constant 0 : i32
    return %c0_i32, %c0_i32_0 : i32, i32
  }
  func.func @transform_3(%arg0: i32) -> (i32, i32) {
    %c0_i32 = arith.constant 0 : i32
    %c0_i32_0 = arith.constant 0 : i32
    %c0_i32_1 = arith.constant 0 : i32
    return %c0_i32, %c0_i32_0 : i32, i32
  }
  func.func @transform_4(%arg0: i32) -> (i32, i32) {
    %c0_i32 = arith.constant 0 : i32
    %c0_i32_0 = arith.constant 0 : i32
    %c0_i32_1 = arith.constant 0 : i32
    return %c0_i32, %c0_i32_0 : i32, i32
  }
  func.func @transform_5(%arg0: i32) -> (i32, i32) {
    %c0_i32 = arith.constant 0 : i32
    %c0_i32_0 = arith.constant 0 : i32
    return %arg0, %c0_i32 : i32, i32
  }
}

</mosaic_0001>

<llo_original>
// kernel: regressor_forward.4
$region0: #{regressor_forward.4}
  #allocation0 [shape = 'u32[]', space=smem, size = 0x4, offset = 0x4, fixed_abs, tag = 'smem constant byte address 0x4 - core index']
  #allocation1 [shape = 'u32[144,128]{1,0:T(1,128)}', space=vmem, size = 0x12000, scoped, tag = 'internal scratch']
  %s0 = inlined_call_operand.vmem [shape: f32[8,32], index: 0, kind: input, shape index: {}]
  %s1 = inlined_call_operand.hbm [shape: f32[32,512], index: 1, kind: input, shape index: {}]
  %s2 = inlined_call_operand.vmem [shape: f32[1,512], index: 2, kind: input, shape index: {}]
  %s3 = inlined_call_operand.vmem [shape: f32[8,512], index: 3, kind: output, shape index: {0}]
  %s4 = inlined_call_operand.vmem [shape: f32[8,512], index: 4, kind: output, shape index: {1}]
  %5 = xla_tuple %s3, %s4
  %s6 = sld [smem:[#allocation0]]
  $region34: #{regressor_forward.4} parent=0
    _
  %s8 = ssub.s32 1, %s6
  %s9 = scalar_select 0, %s8, %s6
  $region1: #{regressor_forward.4} parent=0
    #allocation2 [shape = 'u8[65536]{0}', space=vmem, size = 0x10000, scoped, tag = 'input window, operand 1, single buffered']
    #allocation3 [shape = 's32[1]{0}', space=sflag, size = 0x4, scoped, tag = 'scoped memory for regressor_forward.4']
    %10 = vsyncpa [#allocation3], 0
    // Predicated region
    $region2: #{regressor_forward.4} parent=1 // pred_check
      _
    $region3: #{regressor_forward.4} parent=1 // pred_check_branch
      %12 = sbr.rel (0) target = $region5
    $region4: #{regressor_forward.4} parent=1 // pred_region
      _
    $region5: #{regressor_forward.4} parent=1 // pred_fallthru
      _
    // Predicated region
    $region6: #{regressor_forward.4} parent=1 // pred_check
      _
    $region7: #{regressor_forward.4} parent=1 // pred_check_branch
      %14 = sbr.rel (0) target = $region9
    $region8: #{regressor_forward.4} parent=1 // pred_region
      %s16 = ssub.s32 2048, 2048
      %17 = vsyncadd [#allocation3], %s16
      %s18 = sshll.u32 [#allocation2], 4
      %s19 = int_to_ptr.vmem [resolvable:$true] %s18
      %24 = dma.hbm_to_vmem [thread:$0]  %s1, 2048, %s19, [#allocation3], 512, 512, 32
    $region9: #{regressor_forward.4} parent=1 // pred_fallthru
      _
    // Predicated region
    $region10: #{regressor_forward.4} parent=1 // pred_check
      _
    $region11: #{regressor_forward.4} parent=1 // pred_check_branch
      %26 = sbr.rel (0) target = $region13
    $region12: #{regressor_forward.4} parent=1 // pred_region
      _
    $region13: #{regressor_forward.4} parent=1 // pred_fallthru
      _
    // Predicated region
    $region14: #{regressor_forward.4} parent=1 // pred_check
      _
    $region15: #{regressor_forward.4} parent=1 // pred_check_branch
      %28 = sbr.rel (0) target = $region17
    $region16: #{regressor_forward.4} parent=1 // pred_region
      %29 = dma.done [#allocation3], 2048
    $region17: #{regressor_forward.4} parent=1 // pred_fallthru
      _
    %v30 = vld [vmem:[%s0] sm:$0xff]
    %v31 = vld [vmem:[#allocation2] sm:$0xff]
    %v32 = vld [vmem:[#allocation2 + $0x8] sm:$0xff]
    %v33 = vld [vmem:[#allocation2 + $0x10] sm:$0xff]
    %v34 = vld [vmem:[#allocation2 + $0x18] sm:$0xff]
    %v35 = vld [vmem:[#allocation2 + $0x20] sm:$0xff]
    %v36 = vld [vmem:[#allocation2 + $0x28] sm:$0xff]
    %v37 = vld [vmem:[#allocation2 + $0x30] sm:$0xff]
    %v38 = vld [vmem:[#allocation2 + $0x38] sm:$0xff]
    %v39 = vld [vmem:[#allocation2 + $0x40] sm:$0xff]
    %v40 = vld [vmem:[#allocation2 + $0x48] sm:$0xff]
    %v41 = vld [vmem:[#allocation2 + $0x50] sm:$0xff]
    %v42 = vld [vmem:[#allocation2 + $0x58] sm:$0xff]
    %v43 = vld [vmem:[#allocation2 + $0x60] sm:$0xff]
    %v44 = vld [vmem:[#allocation2 + $0x68] sm:$0xff]
    %v45 = vld [vmem:[#allocation2 + $0x70] sm:$0xff]
    %v46 = vld [vmem:[#allocation2 + $0x78] sm:$0xff]
    %v47 = vld [vmem:[%s2] sm:$0xf]
    %v49 = vlaneseq
    %v50 = vshrl.u32 %v49, 7
    %v51 = vsub.s32 0, %v50
    %v52 = vrot.slane %v47, %v51
    %v53 = vlaneseq
    %v54 = vshrl.u32 %v53, 7
    %v55 = vsub.s32 1, %v54
    %v56 = vrot.slane %v47, %v55
    %v57 = vlaneseq
    %v58 = vshrl.u32 %v57, 7
    %v59 = vsub.s32 2, %v58
    %v60 = vrot.slane %v47, %v59
    %v61 = vlaneseq
    %v62 = vshrl.u32 %v61, 7
    %v63 = vsub.s32 3, %v62
    %v64 = vrot.slane %v47, %v63
    %vm69 = vcmask 261120
    %v71 = vsel %vm69, %v30, 0
    %73 = vmatprep.subr.mxu0 0.0
    %74 = vmatpush1.msra.mxu0 0.0
    %75 = vmatprep.subr.mxu0 0.0
    %76 = vmatpush1.msra.mxu0 0.0
    %77 = vmatprep.subr.mxu0 0.0
    %78 = vmatpush1.msra.mxu0 0.0
    %79 = vmatprep.subr.mxu0 0.0
    %80 = vmatpush1.msra.mxu0 0.0
    %81 = vmatprep.subr.mxu0 0.0
    %82 = vmatpush1.msra.mxu0 0.0
    %83 = vmatprep.subr.mxu0 0.0
    %84 = vmatpush1.msra.mxu0 0.0
    %85 = vmatprep.subr.mxu0 0.0
    %86 = vmatpush1.msra.mxu0 0.0
    %87 = vmatprep.subr.mxu0 0.0
    %88 = vmatpush1.msra.mxu0 0.0
    %89 = vmatprep.subr.mxu0 0.0
    %90 = vmatpush1.msra.mxu0 0.0
    %91 = vmatprep.subr.mxu0 0.0
    %92 = vmatpush1.msra.mxu0 0.0
    %93 = vmatprep.subr.mxu0 0.0
    %94 = vmatpush1.msra.mxu0 0.0
    %95 = vmatprep.subr.mxu0 0.0
    %96 = vmatpush1.msra.mxu0 0.0
    %97 = vmatprep.subr.mxu0 %v44
    %98 = vmatpush1.msra.mxu0 %v43
    %99 = vmatprep.subr.mxu0 %v40
    %100 = vmatpush1.msra.mxu0 %v39
    %101 = vmatprep.subr.mxu0 %v36
    %102 = vmatpush1.msra.mxu0 %v35
    %103 = vmatprep.subr.mxu0 %v32
    %104 = vmatpush1.msra.mxu0 %v31
    %105 = vmatprep.subr.mxu0 0.0
    %106 = vmatpush2.msra.mxu0 0.0
    %107 = vmatprep.subr.mxu0 0.0
    %108 = vmatpush2.msra.mxu0 0.0
    %109 = vmatprep.subr.mxu0 0.0
    %110 = vmatpush2.msra.mxu0 0.0
    %111 = vmatprep.subr.mxu0 0.0
    %112 = vmatpush2.msra.mxu0 0.0
    %113 = vmatprep.subr.mxu0 0.0
    %114 = vmatpush2.msra.mxu0 0.0
    %115 = vmatprep.subr.mxu0 0.0
    %116 = vmatpush2.msra.mxu0 0.0
    %117 = vmatprep.subr.mxu0 0.0
    %118 = vmatpush2.msra.mxu0 0.0
    %119 = vmatprep.subr.mxu0 0.0
    %120 = vmatpush2.msra.mxu0 0.0
    %121 = vmatprep.subr.mxu0 0.0
    %122 = vmatpush2.msra.mxu0 0.0
    %123 = vmatprep.subr.mxu0 0.0
    %124 = vmatpush2.msra.mxu0 0.0
    %125 = vmatprep.subr.mxu0 0.0
    %126 = vmatpush2.msra.mxu0 0.0
    %127 = vmatprep.subr.mxu0 0.0
    %128 = vmatpush2.msra.mxu0 0.0
    %129 = vmatprep.subr.mxu0 0.0
    %130 = vmatpush2.msra.mxu0 0.0
    %131 = vmatprep.subr.mxu0 0.0
    %132 = vmatpush2.msra.mxu0 0.0
    %133 = vmatprep.subr.mxu0 0.0
    %134 = vmatpush2.msra.mxu0 0.0
    %135 = vmatprep.subr.mxu0 0.0
    %136 = vmatpush2.msra.mxu0 0.0
    %137 = vmatprep.mubr.f32.mxu0 0.0
    %138 = vmatmul.mubr.f32.gmra.mxu0 %v71
    %v139 = vpop.f32.mrf.mxu0
    %v140 = vadd.f32 %v52, %v139
    %v141 = vpop.f32.mrf.mxu0
    %v142 = vadd.f32 %v56, %v141
    %143 = vdwg.mxu0
    %144 = vmatprep.subr.mxu0 0.0
    %145 = vmatpush1.msra.mxu0 0.0
    %146 = vmatprep.subr.mxu0 0.0
    %147 = vmatpush1.msra.mxu0 0.0
    %148 = vmatprep.subr.mxu0 0.0
    %149 = vmatpush1.msra.mxu0 0.0
    %150 = vmatprep.subr.mxu0 0.0
    %151 = vmatpush1.msra.mxu0 0.0
    %152 = vmatprep.subr.mxu0 0.0
    %153 = vmatpush1.msra.mxu0 0.0
    %154 = vmatprep.subr.mxu0 0.0
    %155 = vmatpush1.msra.mxu0 0.0
    %156 = vmatprep.subr.mxu0 0.0
    %157 = vmatpush1.msra.mxu0 0.0
    %158 = vmatprep.subr.mxu0 0.0
    %159 = vmatpush1.msra.mxu0 0.0
    %160 = vmatprep.subr.mxu0 0.0
    %161 = vmatpush1.msra.mxu0 0.0
    %162 = vmatprep.subr.mxu0 0.0
    %163 = vmatpush1.msra.mxu0 0.0
    %164 = vmatprep.subr.mxu0 0.0
    %165 = vmatpush1.msra.mxu0 0.0
    %166 = vmatprep.subr.mxu0 0.0
    %167 = vmatpush1.msra.mxu0 0.0
    %168 = vmatprep.subr.mxu0 %v46
    %169 = vmatpush1.msra.mxu0 %v45
    %170 = vmatprep.subr.mxu0 %v42
    %171 = vmatpush1.msra.mxu0 %v41
    %172 = vmatprep.subr.mxu0 %v38
    %173 = vmatpush1.msra.mxu0 %v37
    %174 = vmatprep.subr.mxu0 %v34
    %175 = vmatpush1.msra.mxu0 %v33
    %176 = vmatprep.subr.mxu0 0.0
    %177 = vmatpush2.msra.mxu0 0.0
    %178 = vmatprep.subr.mxu0 0.0
    %179 = vmatpush2.msra.mxu0 0.0
    %180 = vmatprep.subr.mxu0 0.0
    %181 = vmatpush2.msra.mxu0 0.0
    %182 = vmatprep.subr.mxu0 0.0
    %183 = vmatpush2.msra.mxu0 0.0
    %184 = vmatprep.subr.mxu0 0.0
    %185 = vmatpush2.msra.mxu0 0.0
    %186 = vmatprep.subr.mxu0 0.0
    %187 = vmatpush2.msra.mxu0 0.0
    %188 = vmatprep.subr.mxu0 0.0
    %189 = vmatpush2.msra.mxu0 0.0
    %190 = vmatprep.subr.mxu0 0.0
    %191 = vmatpush2.msra.mxu0 0.0
    %192 = vmatprep.subr.mxu0 0.0
    %193 = vmatpush2.msra.mxu0 0.0
    %194 = vmatprep.subr.mxu0 0.0
    %195 = vmatpush2.msra.mxu0 0.0
    %196 = vmatprep.subr.mxu0 0.0
    %197 = vmatpush2.msra.mxu0 0.0
    %198 = vmatprep.subr.mxu0 0.0
    %199 = vmatpush2.msra.mxu0 0.0
    %200 = vmatprep.subr.mxu0 0.0
    %201 = vmatpush2.msra.mxu0 0.0
    %202 = vmatprep.subr.mxu0 0.0
    %203 = vmatpush2.msra.mxu0 0.0
    %204 = vmatprep.subr.mxu0 0.0
    %205 = vmatpush2.msra.mxu0 0.0
    %206 = vmatprep.subr.mxu0 0.0
    %207 = vmatpush2.msra.mxu0 0.0
    %208 = vmatprep.mubr.f32.mxu0 0.0
    %209 = vmatmul.mubr.f32.gmra.mxu0 %v71
    %v210 = vpop.f32.mrf.mxu0
    %v211 = vadd.f32 %v60, %v210
    %v212 = vpop.f32.mrf.mxu0
    %v213 = vadd.f32 %v64, %v212
    %214 = vdwg.mxu0
    %215 = vst [vmem:[%s3] sm:$0xff] %v140
    %216 = vst [vmem:[%s3 + $0x8] sm:$0xff] %v142
    %217 = vst [vmem:[%s3 + $0x10] sm:$0xff] %v211
    %218 = vst [vmem:[%s3 + $0x18] sm:$0xff] %v213
    %v219 = vrot.slane %v140, 4
    %v220 = vadd.f32 %v140, %v219
    %v221 = vrot.slane %v220, 2
    %v222 = vadd.f32 %v220, %v221
    %v223 = vrot.slane %v222, 1
    %v224 = vadd.f32 %v222, %v223
    %v225 = vrot.slane %v142, 4
    %v226 = vadd.f32 %v142, %v225
    %v227 = vrot.slane %v226, 2
    %v228 = vadd.f32 %v226, %v227
    %v229 = vrot.slane %v228, 1
    %v230 = vadd.f32 %v228, %v229
    %v231 = vrot.slane %v211, 4
    %v232 = vadd.f32 %v211, %v231
    %v233 = vrot.slane %v232, 2
    %v234 = vadd.f32 %v232, %v233
    %v235 = vrot.slane %v234, 1
    %v236 = vadd.f32 %v234, %v235
    %v237 = vrot.slane %v213, 4
    %v238 = vadd.f32 %v213, %v237
    %v239 = vrot.slane %v238, 2
    %v240 = vadd.f32 %v238, %v239
    %v241 = vrot.slane %v240, 1
    %v242 = vadd.f32 %v240, %v241
    %v247 = vcombine.low %v224, %v230
    %v248 = vcombine.low %v236, %v242
    %v250 = vunpack.c.l.s4 1966171168
    %v251 = vunpack.c.0.s8 %v250
    %v252 = vlaneseq
    %v253 = vshrl.u32 %v252, 7
    %v254 = vsub.s32 %v251, %v253
    %v255 = vrot.slane %v247, %v254
    %v257 = vunpack.c.l.s4 1966171168
    %v258 = vunpack.c.0.s8 %v257
    %v259 = vlaneseq
    %v260 = vshrl.u32 %v259, 7
    %v261 = vsub.s32 %v258, %v260
    %v262 = vrot.slane %v248, %v261
    %v263 = vcombine.low %v255, %v262
    %v265 = vunpack.c.l.s4 1966171168
    %v266 = vunpack.c.0.s8 %v265
    %v267 = vlaneseq
    %v268 = vshrl.u32 %v267, 7
    %v269 = vsub.s32 %v266, %v268
    %v270 = vrot.slane %v263, %v269
    %v272 = vlaneseq
    %vm273 = vcmp.ge.s32.totalorder %v272, 0
    %vm274 = vcmp.lt.s32.totalorder %v272, 512
    %vm275 = vmand %vm273, %vm274
    %276 = vst.msk [vmem:[%s4] ss:$8 sm:$0xf] %vm275, %v270
    %277 = vst.msk [vmem:[%s4] ss:$8 sm:$0x0] %vm275, %v270
    %v278 = vmul.f32 %v140, %v140
    %v279 = vmul.f32 %v142, %v142
    %v280 = vmul.f32 %v211, %v211
    %v281 = vmul.f32 %v213, %v213
    %v282 = vrot.slane %v278, 4
    %v283 = vadd.f32 %v278, %v282
    %v284 = vrot.slane %v283, 2
    %v285 = vadd.f32 %v283, %v284
    %v286 = vrot.slane %v285, 1
    %v287 = vadd.f32 %v285, %v286
    %v288 = vrot.slane %v279, 4
    %v289 = vadd.f32 %v279, %v288
    %v290 = vrot.slane %v289, 2
    %v291 = vadd.f32 %v289, %v290
    %v292 = vrot.slane %v291, 1
    %v293 = vadd.f32 %v291, %v292
    %v294 = vrot.slane %v280, 4
    %v295 = vadd.f32 %v280, %v294
    %v296 = vrot.slane %v295, 2
    %v297 = vadd.f32 %v295, %v296
    %v298 = vrot.slane %v297, 1
    %v299 = vadd.f32 %v297, %v298
    %v300 = vrot.slane %v281, 4
    %v301 = vadd.f32 %v281, %v300
    %v302 = vrot.slane %v301, 2
    %v303 = vadd.f32 %v301, %v302
    %v304 = vrot.slane %v303, 1
    %v305 = vadd.f32 %v303, %v304
    %v310 = vcombine.low %v287, %v293
    %v311 = vcombine.low %v299, %v305
    %v313 = vunpack.c.l.s4 1966171168
    %v314 = vunpack.c.0.s8 %v313
    %v315 = vlaneseq
    %v316 = vshrl.u32 %v315, 7
    %v317 = vsub.s32 %v314, %v316
    %v318 = vrot.slane %v310, %v317
    %v320 = vunpack.c.l.s4 1966171168
    %v321 = vunpack.c.0.s8 %v320
    %v322 = vlaneseq
    %v323 = vshrl.u32 %v322, 7
    %v324 = vsub.s32 %v321, %v323
    %v325 = vrot.slane %v311, %v324
    %v326 = vcombine.low %v318, %v325
    %v328 = vunpack.c.l.s4 1966171168
    %v329 = vunpack.c.0.s8 %v328
    %v330 = vlaneseq
    %v331 = vshrl.u32 %v330, 7
    %v332 = vsub.s32 %v329, %v331
    %v333 = vrot.slane %v326, %v332
    %s335 = scalar_lea.vmem %s4, 1
    %336 = vst.msk [vmem:[%s335] ss:$8 sm:$0xf] %vm275, %v333
    %337 = vst.msk [vmem:[%s335] ss:$8 sm:$0x0] %vm275, %v333
    // Predicated region
    $region18: #{regressor_forward.4} parent=1 // pred_check
      _
    $region19: #{regressor_forward.4} parent=1 // pred_check_branch
      %339 = sbr.rel (0) target = $region21
    $region20: #{regressor_forward.4} parent=1 // pred_region
      _
    $region21: #{regressor_forward.4} parent=1 // pred_fallthru
      _
    // Predicated region
    $region22: #{regressor_forward.4} parent=1 // pred_check
      _
    $region23: #{regressor_forward.4} parent=1 // pred_check_branch
      %341 = sbr.rel (0) target = $region25
    $region24: #{regressor_forward.4} parent=1 // pred_region
      _
    $region25: #{regressor_forward.4} parent=1 // pred_fallthru
      _
    // Predicated region
    $region26: #{regressor_forward.4} parent=1 // pred_check
      _
    $region27: #{regressor_forward.4} parent=1 // pred_check_branch
      %343 = sbr.rel (0) target = $region29
    $region28: #{regressor_forward.4} parent=1 // pred_region
      _
    $region29: #{regressor_forward.4} parent=1 // pred_fallthru
      _
    // Predicated region
    $region30: #{regressor_forward.4} parent=1 // pred_check
      _
    $region31: #{regressor_forward.4} parent=1 // pred_check_branch
      %345 = sbr.rel (0) target = $region33
    $region32: #{regressor_forward.4} parent=1 // pred_region
      _
    $region33: #{regressor_forward.4} parent=1 // pred_fallthru
      _
    %346 = vsyncpa [#allocation3], 1

// kernel: regressor_forward.6
$region0: #{regressor_forward.6}
  #allocation0 [shape = 'u32[]', space=smem, size = 0x4, offset = 0x4, fixed_abs, tag = 'smem constant byte address 0x4 - core index']
  #allocation1 [shape = 'u32[144,128]{1,0:T(1,128)}', space=vmem, size = 0x12000, scoped, tag = 'internal scratch']
  %s0 = inlined_call_operand.vmem [shape: f32[8,256], index: 0, kind: input, shape index: {}]
  %s1 = inlined_call_operand.vmem [shape: f32[1,256], index: 1, kind: input, shape index: {}]
  %s2 = inlined_call_operand.vmem [shape: f32[1,256], index: 2, kind: input, shape index: {}]
  %s3 = inlined_call_operand.vmem [shape: f32[256,128], index: 3, kind: input, shape index: {}]
  %s4 = inlined_call_operand.vmem [shape: f32[1,128], index: 4, kind: input, shape index: {}]
  %s5 = inlined_call_operand.vmem [shape: f32[8,128], index: 5, kind: output, shape index: {0}]
  %s6 = inlined_call_operand.vmem [shape: f32[8,128], index: 6, kind: output, shape index: {1}]
  %7 = xla_tuple %s5, %s6
  %s8 = sld [smem:[#allocation0]]
  $region38: #{regressor_forward.6} parent=0
    _
  %s10 = ssub.s32 1, %s8
  %s11 = scalar_select 0, %s10, %s8
  // Predicated region
  $region2: #{regressor_forward.6} parent=0 // pred_check
    _
  $region3: #{regressor_forward.6} parent=0 // pred_check_branch
    %13 = sbr.rel (0) target = $region5
  $region4: #{regressor_forward.6} parent=0 // pred_region
    _
  $region5: #{regressor_forward.6} parent=0 // pred_fallthru
    _
  // Predicated region
  $region6: #{regressor_forward.6} parent=0 // pred_check
    _
  $region7: #{regressor_forward.6} parent=0 // pred_check_branch
    %15 = sbr.rel (0) target = $region9
  $region8: #{regressor_forward.6} parent=0 // pred_region
    _
  $region9: #{regressor_forward.6} parent=0 // pred_fallthru
    _
  // Predicated region
  $region10: #{regressor_forward.6} parent=0 // pred_check
    _
  $region11: #{regressor_forward.6} parent=0 // pred_check_branch
    %17 = sbr.rel (0) target = $region13
  $region12: #{regressor_forward.6} parent=0 // pred_region
    _
  $region13: #{regressor_forward.6} parent=0 // pred_fallthru
    _
  // Predicated region
  $region14: #{regressor_forward.6} parent=0 // pred_check
    _
  $region15: #{regressor_forward.6} parent=0 // pred_check_branch
    %19 = sbr.rel (0) target = $region17
  $region16: #{regressor_forward.6} parent=0 // pred_region
    _
  $region17: #{regressor_forward.6} parent=0 // pred_fallthru
    _
  // Predicated region
  $region18: #{regressor_forward.6} parent=0 // pred_check
    _
  $region19: #{regressor_forward.6} parent=0 // pred_check_branch
    %21 = sbr.rel (0) target = $region21
  $region20: #{regressor_forward.6} parent=0 // pred_region
    _
  $region21: #{regressor_forward.6} parent=0 // pred_fallthru
    _
  %v22 = vld [vmem:[%s0] sm:$0xff]
  %v23 = vld [vmem:[%s0 + $0x8] sm:$0xff]
  %v24 = vld [vmem:[%s1] sm:$0x3]
  %v26 = vlaneseq
  %v27 = vshrl.u32 %v26, 7
  %v28 = vsub.s32 0, %v27
  %v29 = vrot.slane %v24, %v28
  %v30 = vlaneseq
  %v31 = vshrl.u32 %v30, 7
  %v32 = vsub.s32 1, %v31
  %v33 = vrot.slane %v24, %v32
  %v36 = vmul.f32 %v22, %v29
  %v37 = vmul.f32 %v23, %v33
  %v38 = vld [vmem:[%s2] sm:$0x3]
  %v40 = vlaneseq
  %v41 = vshrl.u32 %v40, 7
  %v42 = vsub.s32 0, %v41
  %v43 = vrot.slane %v38, %v42
  %v44 = vlaneseq
  %v45 = vshrl.u32 %v44, 7
  %v46 = vsub.s32 1, %v45
  %v47 = vrot.slane %v38, %v46
  %v50 = vadd.f32 %v36, %v43
  %v51 = vadd.f32 %v37, %v47
  %v52 = vmax.f32 %v50, 0.0
  %v53 = vmax.f32 %v51, 0.0
  %v54 = vld [vmem:[%s3] sm:$0xff]
  %v55 = vld [vmem:[%s3 + $0x8] sm:$0xff]
  %v56 = vld [vmem:[%s3 + $0x10] sm:$0xff]
  %v57 = vld [vmem:[%s3 + $0x18] sm:$0xff]
  %v58 = vld [vmem:[%s3 + $0x20] sm:$0xff]
  %v59 = vld [vmem:[%s3 + $0x28] sm:$0xff]
  %v60 = vld [vmem:[%s3 + $0x30] sm:$0xff]
  %v61 = vld [vmem:[%s3 + $0x38] sm:$0xff]
  %v62 = vld [vmem:[%s3 + $0x40] sm:$0xff]
  %v63 = vld [vmem:[%s3 + $0x48] sm:$0xff]
  %v64 = vld [vmem:[%s3 + $0x50] sm:$0xff]
  %v65 = vld [vmem:[%s3 + $0x58] sm:$0xff]
  %v66 = vld [vmem:[%s3 + $0x60] sm:$0xff]
  %v67 = vld [vmem:[%s3 + $0x68] sm:$0xff]
  %v68 = vld [vmem:[%s3 + $0x70] sm:$0xff]
  %v69 = vld [vmem:[%s3 + $0x78] sm:$0xff]
  %v70 = vld [vmem:[%s3 + $0x80] sm:$0xff]
  %v71 = vld [vmem:[%s3 + $0x88] sm:$0xff]
  %v72 = vld [vmem:[%s3 + $0x90] sm:$0xff]
  %v73 = vld [vmem:[%s3 + $0x98] sm:$0xff]
  %v74 = vld [vmem:[%s3 + $0xa0] sm:$0xff]
  %v75 = vld [vmem:[%s3 + $0xa8] sm:$0xff]
  %v76 = vld [vmem:[%s3 + $0xb0] sm:$0xff]
  %v77 = vld [vmem:[%s3 + $0xb8] sm:$0xff]
  %v78 = vld [vmem:[%s3 + $0xc0] sm:$0xff]
  %v79 = vld [vmem:[%s3 + $0xc8] sm:$0xff]
  %v80 = vld [vmem:[%s3 + $0xd0] sm:$0xff]
  %v81 = vld [vmem:[%s3 + $0xd8] sm:$0xff]
  %v82 = vld [vmem:[%s3 + $0xe0] sm:$0xff]
  %v83 = vld [vmem:[%s3 + $0xe8] sm:$0xff]
  %v84 = vld [vmem:[%s3 + $0xf0] sm:$0xff]
  %v85 = vld [vmem:[%s3 + $0xf8] sm:$0xff]
  %v86 = vld [vmem:[%s4] sm:$0x1]
  %v88 = vlaneseq
  %v89 = vshrl.u32 %v88, 7
  %v90 = vsub.s32 0, %v89
  %v91 = vrot.slane %v86, %v90
  %93 = vmatprep.subr.mxu0 0.0
  %94 = vmatpush1.msra.mxu0 %v69
  %95 = vmatprep.subr.mxu0 0.0
  %96 = vmatpush1.msra.mxu0 %v68
  %97 = vmatprep.subr.mxu0 0.0
  %98 = vmatpush1.msra.mxu0 %v67
  %99 = vmatprep.subr.mxu0 0.0
  %100 = vmatpush1.msra.mxu0 %v66
  %101 = vmatprep.subr.mxu0 0.0
  %102 = vmatpush1.msra.mxu0 %v65
  %103 = vmatprep.subr.mxu0 0.0
  %104 = vmatpush1.msra.mxu0 %v64
  %105 = vmatprep.subr.mxu0 0.0
  %106 = vmatpush1.msra.mxu0 %v63
  %107 = vmatprep.subr.mxu0 0.0
  %108 = vmatpush1.msra.mxu0 %v62
  %109 = vmatprep.subr.mxu0 0.0
  %110 = vmatpush1.msra.mxu0 %v61
  %111 = vmatprep.subr.mxu0 0.0
  %112 = vmatpush1.msra.mxu0 %v60
  %113 = vmatprep.subr.mxu0 0.0
  %114 = vmatpush1.msra.mxu0 %v59
  %115 = vmatprep.subr.mxu0 0.0
  %116 = vmatpush1.msra.mxu0 %v58
  %117 = vmatprep.subr.mxu0 0.0
  %118 = vmatpush1.msra.mxu0 %v57
  %119 = vmatprep.subr.mxu0 0.0
  %120 = vmatpush1.msra.mxu0 %v56
  %121 = vmatprep.subr.mxu0 0.0
  %122 = vmatpush1.msra.mxu0 %v55
  %123 = vmatprep.subr.mxu0 0.0
  %124 = vmatpush1.msra.mxu0 %v54
  %125 = vmatprep.subr.mxu0 0.0
  %126 = vmatpush2.msra.mxu0 %v85
  %127 = vmatprep.subr.mxu0 0.0
  %128 = vmatpush2.msra.mxu0 %v84
  %129 = vmatprep.subr.mxu0 0.0
  %130 = vmatpush2.msra.mxu0 %v83
  %131 = vmatprep.subr.mxu0 0.0
  %132 = vmatpush2.msra.mxu0 %v82
  %133 = vmatprep.subr.mxu0 0.0
  %134 = vmatpush2.msra.mxu0 %v81
  %135 = vmatprep.subr.mxu0 0.0
  %136 = vmatpush2.msra.mxu0 %v80
  %137 = vmatprep.subr.mxu0 0.0
  %138 = vmatpush2.msra.mxu0 %v79
  %139 = vmatprep.subr.mxu0 0.0
  %140 = vmatpush2.msra.mxu0 %v78
  %141 = vmatprep.subr.mxu0 0.0
  %142 = vmatpush2.msra.mxu0 %v77
  %143 = vmatprep.subr.mxu0 0.0
  %144 = vmatpush2.msra.mxu0 %v76
  %145 = vmatprep.subr.mxu0 0.0
  %146 = vmatpush2.msra.mxu0 %v75
  %147 = vmatprep.subr.mxu0 0.0
  %148 = vmatpush2.msra.mxu0 %v74
  %149 = vmatprep.subr.mxu0 0.0
  %150 = vmatpush2.msra.mxu0 %v73
  %151 = vmatprep.subr.mxu0 0.0
  %152 = vmatpush2.msra.mxu0 %v72
  %153 = vmatprep.subr.mxu0 0.0
  %154 = vmatpush2.msra.mxu0 %v71
  %155 = vmatprep.subr.mxu0 0.0
  %156 = vmatpush2.msra.mxu0 %v70
  %157 = vmatprep.mubr.f32.mxu0 %v53
  %158 = vmatmul.mubr.f32.gmra.mxu0 %v52
  %v159 = vpop.f32.mrf.mxu0
  %v160 = vadd.f32 %v91, %v159
  %v161 = vpop.f32.mrf.mxu0
  %162 = vdwg.mxu0
  %163 = vst [vmem:[%s5] sm:$0xff] %v160
  %v164 = vrot.slane %v160, 4
  %v165 = vadd.f32 %v160, %v164
  %v166 = vrot.slane %v165, 2
  %v167 = vadd.f32 %v165, %v166
  %v168 = vrot.slane %v167, 1
  %v169 = vadd.f32 %v167, %v168
  %170 = vst [vmem:[%s6] sm:$0x1] %v169
  %v171 = vmul.f32 %v160, %v160
  %v172 = vrot.slane %v171, 4
  %v173 = vadd.f32 %v171, %v172
  %v174 = vrot.slane %v173, 2
  %v175 = vadd.f32 %v173, %v174
  %v176 = vrot.slane %v175, 1
  %v177 = vadd.f32 %v175, %v176
  %178 = vst [vmem:[%s6 + $0x1] sm:$0x1] %v177
  // Predicated region
  $region22: #{regressor_forward.6} parent=0 // pred_check
    _
  $region23: #{regressor_forward.6} parent=0 // pred_check_branch
    %180 = sbr.rel (0) target = $region25
  $region24: #{regressor_forward.6} parent=0 // pred_region
    _
  $region25: #{regressor_forward.6} parent=0 // pred_fallthru
    _
  // Predicated region
  $region26: #{regressor_forward.6} parent=0 // pred_check
    _
  $region27: #{regressor_forward.6} parent=0 // pred_check_branch
    %182 = sbr.rel (0) target = $region29
  $region28: #{regressor_forward.6} parent=0 // pred_region
    _
  $region29: #{regressor_forward.6} parent=0 // pred_fallthru
    _
  // Predicated region
  $region30: #{regressor_forward.6} parent=0 // pred_check
    _
  $region31: #{regressor_forward.6} parent=0 // pred_check_branch
    %184 = sbr.rel (0) target = $region33
  $region32: #{regressor_forward.6} parent=0 // pred_region
    _
  $region33: #{regressor_forward.6} parent=0 // pred_fallthru
    _
  // Predicated region
  $region34: #{regressor_forward.6} parent=0 // pred_check
    _
  $region35: #{regressor_forward.6} parent=0 // pred_check_branch
    %186 = sbr.rel (0) target = $region37
  $region36: #{regressor_forward.6} parent=0 // pred_region
    _
  $region37: #{regressor_forward.6} parent=0 // pred_fallthru
    _

// kernel: regressor_forward.5
$region0: #{regressor_forward.5}
  #allocation0 [shape = 'u32[]', space=smem, size = 0x4, offset = 0x4, fixed_abs, tag = 'smem constant byte address 0x4 - core index']
  #allocation1 [shape = 'u32[144,128]{1,0:T(1,128)}', space=vmem, size = 0x12000, scoped, tag = 'internal scratch']
  %s0 = inlined_call_operand.vmem [shape: f32[8,512], index: 0, kind: input, shape index: {}]
  %s1 = inlined_call_operand.vmem [shape: f32[1,512], index: 1, kind: input, shape index: {}]
  %s2 = inlined_call_operand.vmem [shape: f32[1,512], index: 2, kind: input, shape index: {}]
  %s3 = inlined_call_operand.hbm [shape: f32[512,256], index: 3, kind: input, shape index: {}]
  %s4 = inlined_call_operand.vmem [shape: f32[1,256], index: 4, kind: input, shape index: {}]
  %s5 = inlined_call_operand.vmem [shape: f32[8,256], index: 5, kind: output, shape index: {0}]
  %s6 = inlined_call_operand.vmem [shape: f32[8,256], index: 6, kind: output, shape index: {1}]
  %7 = xla_tuple %s5, %s6
  %s8 = sld [smem:[#allocation0]]
  $region42: #{regressor_forward.5} parent=0
    _
  %s10 = ssub.s32 1, %s8
  %s11 = scalar_select 0, %s10, %s8
  $region1: #{regressor_forward.5} parent=0
    #allocation2 [shape = 'u8[524288]{0}', space=vmem, size = 0x80000, scoped, tag = 'input window, operand 3, single buffered']
    #allocation3 [shape = 's32[1]{0}', space=sflag, size = 0x4, scoped, tag = 'scoped memory for regressor_forward.5']
    %12 = vsyncpa [#allocation3], 0
    // Predicated region
    $region2: #{regressor_forward.5} parent=1 // pred_check
      _
    $region3: #{regressor_forward.5} parent=1 // pred_check_branch
      %14 = sbr.rel (0) target = $region5
    $region4: #{regressor_forward.5} parent=1 // pred_region
      _
    $region5: #{regressor_forward.5} parent=1 // pred_fallthru
      _
    // Predicated region
    $region6: #{regressor_forward.5} parent=1 // pred_check
      _
    $region7: #{regressor_forward.5} parent=1 // pred_check_branch
      %16 = sbr.rel (0) target = $region9
    $region8: #{regressor_forward.5} parent=1 // pred_region
      _
    $region9: #{regressor_forward.5} parent=1 // pred_fallthru
      _
    // Predicated region
    $region10: #{regressor_forward.5} parent=1 // pred_check
      _
    $region11: #{regressor_forward.5} parent=1 // pred_check_branch
      %18 = sbr.rel (0) target = $region13
    $region12: #{regressor_forward.5} parent=1 // pred_region
      _
    $region13: #{regressor_forward.5} parent=1 // pred_fallthru
      _
    // Predicated region
    $region14: #{regressor_forward.5} parent=1 // pred_check
      _
    $region15: #{regressor_forward.5} parent=1 // pred_check_branch
      %20 = sbr.rel (0) target = $region17
    $region16: #{regressor_forward.5} parent=1 // pred_region
      %s22 = ssub.s32 16384, 16384
      %23 = vsyncadd [#allocation3], %s22
      %s24 = sshll.u32 [#allocation2], 4
      %s25 = int_to_ptr.vmem [resolvable:$true] %s24
      %30 = dma.hbm_to_vmem [thread:$0]  %s3, 16384, %s25, [#allocation3], 256, 256, 16
    $region17: #{regressor_forward.5} parent=1 // pred_fallthru
      _
    // Predicated region
    $region18: #{regressor_forward.5} parent=1 // pred_check
      _
    $region19: #{regressor_forward.5} parent=1 // pred_check_branch
      %32 = sbr.rel (0) target = $region21
    $region20: #{regressor_forward.5} parent=1 // pred_region
      _
    $region21: #{regressor_forward.5} parent=1 // pred_fallthru
      _
    // Predicated region
    $region22: #{regressor_forward.5} parent=1 // pred_check
      _
    $region23: #{regressor_forward.5} parent=1 // pred_check_branch
      %34 = sbr.rel (0) target = $region25
    $region24: #{regressor_forward.5} parent=1 // pred_region
      %35 = dma.done [#allocation3], 16384
    $region25: #{regressor_forward.5} parent=1 // pred_fallthru
      _
    %v36 = vld [vmem:[%s0] sm:$0xff]
    %v37 = vld [vmem:[%s0 + $0x8] sm:$0xff]
    %v38 = vld [vmem:[%s0 + $0x10] sm:$0xff]
    %v39 = vld [vmem:[%s0 + $0x18] sm:$0xff]
    %v40 = vld [vmem:[%s1] sm:$0xf]
    %v42 = vlaneseq
    %v43 = vshrl.u32 %v42, 7
    %v44 = vsub.s32 0, %v43
    %v45 = vrot.slane %v40, %v44
    %v46 = vlaneseq
    %v47 = vshrl.u32 %v46, 7
    %v48 = vsub.s32 1, %v47
    %v49 = vrot.slane %v40, %v48
    %v50 = vlaneseq
    %v51 = vshrl.u32 %v50, 7
    %v52 = vsub.s32 2, %v51
    %v53 = vrot.slane %v40, %v52
    %v54 = vlaneseq
    %v55 = vshrl.u32 %v54, 7
    %v56 = vsub.s32 3, %v55
    %v57 = vrot.slane %v40, %v56
    %v62 = vmul.f32 %v36, %v45
    %v63 = vmul.f32 %v37, %v49
    %v64 = vmul.f32 %v38, %v53
    %v65 = vmul.f32 %v39, %v57
    %v66 = vld [vmem:[%s2] sm:$0xf]
    %v68 = vlaneseq
    %v69 = vshrl.u32 %v68, 7
    %v70 = vsub.s32 0, %v69
    %v71 = vrot.slane %v66, %v70
    %v72 = vlaneseq
    %v73 = vshrl.u32 %v72, 7
    %v74 = vsub.s32 1, %v73
    %v75 = vrot.slane %v66, %v74
    %v76 = vlaneseq
    %v77 = vshrl.u32 %v76, 7
    %v78 = vsub.s32 2, %v77
    %v79 = vrot.slane %v66, %v78
    %v80 = vlaneseq
    %v81 = vshrl.u32 %v80, 7
    %v82 = vsub.s32 3, %v81
    %v83 = vrot.slane %v66, %v82
    %v88 = vadd.f32 %v62, %v71
    %v89 = vadd.f32 %v63, %v75
    %v90 = vadd.f32 %v64, %v79
    %v91 = vadd.f32 %v65, %v83
    %v92 = vmax.f32 %v88, 0.0
    %v93 = vmax.f32 %v89, 0.0
    %v94 = vmax.f32 %v90, 0.0
    %v95 = vmax.f32 %v91, 0.0
    %v96 = vld [vmem:[#allocation2] sm:$0xff]
    %v97 = vld [vmem:[#allocation2 + $0x8] sm:$0xff]
    %v98 = vld [vmem:[#allocation2 + $0x10] sm:$0xff]
    %v99 = vld [vmem:[#allocation2 + $0x18] sm:$0xff]
    %v100 = vld [vmem:[#allocation2 + $0x20] sm:$0xff]
    %v101 = vld [vmem:[#allocation2 + $0x28] sm:$0xff]
    %v102 = vld [vmem:[#allocation2 + $0x30] sm:$0xff]
    %v103 = vld [vmem:[#allocation2 + $0x38] sm:$0xff]
    %v104 = vld [vmem:[#allocation2 + $0x40] sm:$0xff]
    %v105 = vld [vmem:[#allocation2 + $0x48] sm:$0xff]
    %v106 = vld [vmem:[#allocation2 + $0x50] sm:$0xff]
    %v107 = vld [vmem:[#allocation2 + $0x58] sm:$0xff]
    %v108 = vld [vmem:[#allocation2 + $0x60] sm:$0xff]
    %v109 = vld [vmem:[#allocation2 + $0x68] sm:$0xff]
    %v110 = vld [vmem:[#allocation2 + $0x70] sm:$0xff]
    %v111 = vld [vmem:[#allocation2 + $0x78] sm:$0xff]
    %v112 = vld [vmem:[#allocation2 + $0x80] sm:$0xff]
    %v113 = vld [vmem:[#allocation2 + $0x88] sm:$0xff]
    %v114 = vld [vmem:[#allocation2 + $0x90] sm:$0xff]
    %v115 = vld [vmem:[#allocation2 + $0x98] sm:$0xff]
    %v116 = vld [vmem:[#allocation2 + $0xa0] sm:$0xff]
    %v117 = vld [vmem:[#allocation2 + $0xa8] sm:$0xff]
    %v118 = vld [vmem:[#allocation2 + $0xb0] sm:$0xff]
    %v119 = vld [vmem:[#allocation2 + $0xb8] sm:$0xff]
    %v120 = vld [vmem:[#allocation2 + $0xc0] sm:$0xff]
    %v121 = vld [vmem:[#allocation2 + $0xc8] sm:$0xff]
    %v122 = vld [vmem:[#allocation2 + $0xd0] sm:$0xff]
    %v123 = vld [vmem:[#allocation2 + $0xd8] sm:$0xff]
    %v124 = vld [vmem:[#allocation2 + $0xe0] sm:$0xff]
    %v125 = vld [vmem:[#allocation2 + $0xe8] sm:$0xff]
    %v126 = vld [vmem:[#allocation2 + $0xf0] sm:$0xff]
    %v127 = vld [vmem:[#allocation2 + $0xf8] sm:$0xff]
    %v128 = vld [vmem:[#allocation2 + $0x100] sm:$0xff]
    %v129 = vld [vmem:[#allocation2 + $0x108] sm:$0xff]
    %v130 = vld [vmem:[#allocation2 + $0x110] sm:$0xff]
    %v131 = vld [vmem:[#allocation2 + $0x118] sm:$0xff]
    %v132 = vld [vmem:[#allocation2 + $0x120] sm:$0xff]
    %v133 = vld [vmem:[#allocation2 + $0x128] sm:$0xff]
    %v134 = vld [vmem:[#allocation2 + $0x130] sm:$0xff]
    %v135 = vld [vmem:[#allocation2 + $0x138] sm:$0xff]
    %v136 = vld [vmem:[#allocation2 + $0x140] sm:$0xff]
    %v137 = vld [vmem:[#allocation2 + $0x148] sm:$0xff]
    %v138 = vld [vmem:[#allocation2 + $0x150] sm:$0xff]
    %v139 = vld [vmem:[#allocation2 + $0x158] sm:$0xff]
    %v140 = vld [vmem:[#allocation2 + $0x160] sm:$0xff]
    %v141 = vld [vmem:[#allocation2 + $0x168] sm:$0xff]
    %v142 = vld [vmem:[#allocation2 + $0x170] sm:$0xff]
    %v143 = vld [vmem:[#allocation2 + $0x178] sm:$0xff]
    %v144 = vld [vmem:[#allocation2 + $0x180] sm:$0xff]
    %v145 = vld [vmem:[#allocation2 + $0x188] sm:$0xff]
    %v146 = vld [vmem:[#allocation2 + $0x190] sm:$0xff]
    %v147 = vld [vmem:[#allocation2 + $0x198] sm:$0xff]
    %v148 = vld [vmem:[#allocation2 + $0x1a0] sm:$0xff]
    %v149 = vld [vmem:[#allocation2 + $0x1a8] sm:$0xff]
    %v150 = vld [vmem:[#allocation2 + $0x1b0] sm:$0xff]
    %v151 = vld [vmem:[#allocation2 + $0x1b8] sm:$0xff]
    %v152 = vld [vmem:[#allocation2 + $0x1c0] sm:$0xff]
    %v153 = vld [vmem:[#allocation2 + $0x1c8] sm:$0xff]
    %v154 = vld [vmem:[#allocation2 + $0x1d0] sm:$0xff]
    %v155 = vld [vmem:[#allocation2 + $0x1d8] sm:$0xff]
    %v156 = vld [vmem:[#allocation2 + $0x1e0] sm:$0xff]
    %v157 = vld [vmem:[#allocation2 + $0x1e8] sm:$0xff]
    %v158 = vld [vmem:[#allocation2 + $0x1f0] sm:$0xff]
    %v159 = vld [vmem:[#allocation2 + $0x1f8] sm:$0xff]
    %v160 = vld [vmem:[#allocation2 + $0x200] sm:$0xff]
    %v161 = vld [vmem:[#allocation2 + $0x208] sm:$0xff]
    %v162 = vld [vmem:[#allocation2 + $0x210] sm:$0xff]
    %v163 = vld [vmem:[#allocation2 + $0x218] sm:$0xff]
    %v164 = vld [vmem:[#allocation2 + $0x220] sm:$0xff]
    %v165 = vld [vmem:[#allocation2 + $0x228] sm:$0xff]
    %v166 = vld [vmem:[#allocation2 + $0x230] sm:$0xff]
    %v167 = vld [vmem:[#allocation2 + $0x238] sm:$0xff]
    %v168 = vld [vmem:[#allocation2 + $0x240] sm:$0xff]
    %v169 = vld [vmem:[#allocation2 + $0x248] sm:$0xff]
    %v170 = vld [vmem:[#allocation2 + $0x250] sm:$0xff]
    %v171 = vld [vmem:[#allocation2 + $0x258] sm:$0xff]
    %v172 = vld [vmem:[#allocation2 + $0x260] sm:$0xff]
    %v173 = vld [vmem:[#allocation2 + $0x268] sm:$0xff]
    %v174 = vld [vmem:[#allocation2 + $0x270] sm:$0xff]
    %v175 = vld [vmem:[#allocation2 + $0x278] sm:$0xff]
    %v176 = vld [vmem:[#allocation2 + $0x280] sm:$0xff]
    %v177 = vld [vmem:[#allocation2 + $0x288] sm:$0xff]
    %v178 = vld [vmem:[#allocation2 + $0x290] sm:$0xff]
    %v179 = vld [vmem:[#allocation2 + $0x298] sm:$0xff]
    %v180 = vld [vmem:[#allocation2 + $0x2a0] sm:$0xff]
    %v181 = vld [vmem:[#allocation2 + $0x2a8] sm:$0xff]
    %v182 = vld [vmem:[#allocation2 + $0x2b0] sm:$0xff]
    %v183 = vld [vmem:[#allocation2 + $0x2b8] sm:$0xff]
    %v184 = vld [vmem:[#allocation2 + $0x2c0] sm:$0xff]
    %v185 = vld [vmem:[#allocation2 + $0x2c8] sm:$0xff]
    %v186 = vld [vmem:[#allocation2 + $0x2d0] sm:$0xff]
    %v187 = vld [vmem:[#allocation2 + $0x2d8] sm:$0xff]
    %v188 = vld [vmem:[#allocation2 + $0x2e0] sm:$0xff]
    %v189 = vld [vmem:[#allocation2 + $0x2e8] sm:$0xff]
    %v190 = vld [vmem:[#allocation2 + $0x2f0] sm:$0xff]
    %v191 = vld [vmem:[#allocation2 + $0x2f8] sm:$0xff]
    %v192 = vld [vmem:[#allocation2 + $0x300] sm:$0xff]
    %v193 = vld [vmem:[#allocation2 + $0x308] sm:$0xff]
    %v194 = vld [vmem:[#allocation2 + $0x310] sm:$0xff]
    %v195 = vld [vmem:[#allocation2 + $0x318] sm:$0xff]
    %v196 = vld [vmem:[#allocation2 + $0x320] sm:$0xff]
    %v197 = vld [vmem:[#allocation2 + $0x328] sm:$0xff]
    %v198 = vld [vmem:[#allocation2 + $0x330] sm:$0xff]
    %v199 = vld [vmem:[#allocation2 + $0x338] sm:$0xff]
    %v200 = vld [vmem:[#allocation2 + $0x340] sm:$0xff]
    %v201 = vld [vmem:[#allocation2 + $0x348] sm:$0xff]
    %v202 = vld [vmem:[#allocation2 + $0x350] sm:$0xff]
    %v203 = vld [vmem:[#allocation2 + $0x358] sm:$0xff]
    %v204 = vld [vmem:[#allocation2 + $0x360] sm:$0xff]
    %v205 = vld [vmem:[#allocation2 + $0x368] sm:$0xff]
    %v206 = vld [vmem:[#allocation2 + $0x370] sm:$0xff]
    %v207 = vld [vmem:[#allocation2 + $0x378] sm:$0xff]
    %v208 = vld [vmem:[#allocation2 + $0x380] sm:$0xff]
    %v209 = vld [vmem:[#allocation2 + $0x388] sm:$0xff]
    %v210 = vld [vmem:[#allocation2 + $0x390] sm:$0xff]
    %v211 = vld [vmem:[#allocation2 + $0x398] sm:$0xff]
    %v212 = vld [vmem:[#allocation2 + $0x3a0] sm:$0xff]
    %v213 = vld [vmem:[#allocation2 + $0x3a8] sm:$0xff]
    %v214 = vld [vmem:[#allocation2 + $0x3b0] sm:$0xff]
    %v215 = vld [vmem:[#allocation2 + $0x3b8] sm:$0xff]
    %v216 = vld [vmem:[#allocation2 + $0x3c0] sm:$0xff]
    %v217 = vld [vmem:[#allocation2 + $0x3c8] sm:$0xff]
    %v218 = vld [vmem:[#allocation2 + $0x3d0] sm:$0xff]
    %v219 = vld [vmem:[#allocation2 + $0x3d8] sm:$0xff]
    %v220 = vld [vmem:[#allocation2 + $0x3e0] sm:$0xff]
    %v221 = vld [vmem:[#allocation2 + $0x3e8] sm:$0xff]
    %v222 = vld [vmem:[#allocation2 + $0x3f0] sm:$0xff]
    %v223 = vld [vmem:[#allocation2 + $0x3f8] sm:$0xff]
    %v224 = vld [vmem:[%s4] sm:$0x3]
    %v226 = vlaneseq
    %v227 = vshrl.u32 %v226, 7
    %v228 = vsub.s32 0, %v227
    %v229 = vrot.slane %v224, %v228
    %v230 = vlaneseq
    %v231 = vshrl.u32 %v230, 7
    %v232 = vsub.s32 1, %v231
    %v233 = vrot.slane %v224, %v232
    %236 = vmatprep.subr.mxu0 %v127
    %237 = vmatpush1.msra.mxu0 %v126
    %238 = vmatprep.subr.mxu0 %v125
    %239 = vmatpush1.msra.mxu0 %v124
    %240 = vmatprep.subr.mxu0 %v123
    %241 = vmatpush1.msra.mxu0 %v122
    %242 = vmatprep.subr.mxu0 %v121
    %243 = vmatpush1.msra.mxu0 %v120
    %244 = vmatprep.subr.mxu0 %v119
    %245 = vmatpush1.msra.mxu0 %v118
    %246 = vmatprep.subr.mxu0 %v117
    %247 = vmatpush1.msra.mxu0 %v116
    %248 = vmatprep.subr.mxu0 %v115
    %249 = vmatpush1.msra.mxu0 %v114
    %250 = vmatprep.subr.mxu0 %v113
    %251 = vmatpush1.msra.mxu0 %v112
    %252 = vmatprep.subr.mxu0 %v111
    %253 = vmatpush1.msra.mxu0 %v110
    %254 = vmatprep.subr.mxu0 %v109
    %255 = vmatpush1.msra.mxu0 %v108
    %256 = vmatprep.subr.mxu0 %v107
    %257 = vmatpush1.msra.mxu0 %v106
    %258 = vmatprep.subr.mxu0 %v105
    %259 = vmatpush1.msra.mxu0 %v104
    %260 = vmatprep.subr.mxu0 %v103
    %261 = vmatpush1.msra.mxu0 %v102
    %262 = vmatprep.subr.mxu0 %v101
    %263 = vmatpush1.msra.mxu0 %v100
    %264 = vmatprep.subr.mxu0 %v99
    %265 = vmatpush1.msra.mxu0 %v98
    %266 = vmatprep.subr.mxu0 %v97
    %267 = vmatpush1.msra.mxu0 %v96
    %268 = vmatprep.subr.mxu0 %v159
    %269 = vmatpush2.msra.mxu0 %v158
    %270 = vmatprep.subr.mxu0 %v157
    %271 = vmatpush2.msra.mxu0 %v156
    %272 = vmatprep.subr.mxu0 %v155
    %273 = vmatpush2.msra.mxu0 %v154
    %274 = vmatprep.subr.mxu0 %v153
    %275 = vmatpush2.msra.mxu0 %v152
    %276 = vmatprep.subr.mxu0 %v151
    %277 = vmatpush2.msra.mxu0 %v150
    %278 = vmatprep.subr.mxu0 %v149
    %279 = vmatpush2.msra.mxu0 %v148
    %280 = vmatprep.subr.mxu0 %v147
    %281 = vmatpush2.msra.mxu0 %v146
    %282 = vmatprep.subr.mxu0 %v145
    %283 = vmatpush2.msra.mxu0 %v144
    %284 = vmatprep.subr.mxu0 %v143
    %285 = vmatpush2.msra.mxu0 %v142
    %286 = vmatprep.subr.mxu0 %v141
    %287 = vmatpush2.msra.mxu0 %v140
    %288 = vmatprep.subr.mxu0 %v139
    %289 = vmatpush2.msra.mxu0 %v138
    %290 = vmatprep.subr.mxu0 %v137
    %291 = vmatpush2.msra.mxu0 %v136
    %292 = vmatprep.subr.mxu0 %v135
    %293 = vmatpush2.msra.mxu0 %v134
    %294 = vmatprep.subr.mxu0 %v133
    %295 = vmatpush2.msra.mxu0 %v132
    %296 = vmatprep.subr.mxu0 %v131
    %297 = vmatpush2.msra.mxu0 %v130
    %298 = vmatprep.subr.mxu0 %v129
    %299 = vmatpush2.msra.mxu0 %v128
    %300 = vmatprep.mubr.f32.mxu0 %v93
    %301 = vmatmul.mubr.f32.gmra.mxu0 %v92
    %v302 = vpop.f32.mrf.mxu0
    %v303 = vadd.f32 %v229, %v302
    %v304 = vpop.f32.mrf.mxu0
    %v305 = vadd.f32 %v233, %v304
    %306 = vdwg.mxu0
    %307 = vmatprep.subr.mxu0 %v191
    %308 = vmatpush1.msra.mxu0 %v190
    %309 = vmatprep.subr.mxu0 %v189
    %310 = vmatpush1.msra.mxu0 %v188
    %311 = vmatprep.subr.mxu0 %v187
    %312 = vmatpush1.msra.mxu0 %v186
    %313 = vmatprep.subr.mxu0 %v185
    %314 = vmatpush1.msra.mxu0 %v184
    %315 = vmatprep.subr.mxu0 %v183
    %316 = vmatpush1.msra.mxu0 %v182
    %317 = vmatprep.subr.mxu0 %v181
    %318 = vmatpush1.msra.mxu0 %v180
    %319 = vmatprep.subr.mxu0 %v179
    %320 = vmatpush1.msra.mxu0 %v178
    %321 = vmatprep.subr.mxu0 %v177
    %322 = vmatpush1.msra.mxu0 %v176
    %323 = vmatprep.subr.mxu0 %v175
    %324 = vmatpush1.msra.mxu0 %v174
    %325 = vmatprep.subr.mxu0 %v173
    %326 = vmatpush1.msra.mxu0 %v172
    %327 = vmatprep.subr.mxu0 %v171
    %328 = vmatpush1.msra.mxu0 %v170
    %329 = vmatprep.subr.mxu0 %v169
    %330 = vmatpush1.msra.mxu0 %v168
    %331 = vmatprep.subr.mxu0 %v167
    %332 = vmatpush1.msra.mxu0 %v166
    %333 = vmatprep.subr.mxu0 %v165
    %334 = vmatpush1.msra.mxu0 %v164
    %335 = vmatprep.subr.mxu0 %v163
    %336 = vmatpush1.msra.mxu0 %v162
    %337 = vmatprep.subr.mxu0 %v161
    %338 = vmatpush1.msra.mxu0 %v160
    %339 = vmatprep.subr.mxu0 %v223
    %340 = vmatpush2.msra.mxu0 %v222
    %341 = vmatprep.subr.mxu0 %v221
    %342 = vmatpush2.msra.mxu0 %v220
    %343 = vmatprep.subr.mxu0 %v219
    %344 = vmatpush2.msra.mxu0 %v218
    %345 = vmatprep.subr.mxu0 %v217
    %346 = vmatpush2.msra.mxu0 %v216
    %347 = vmatprep.subr.mxu0 %v215
    %348 = vmatpush2.msra.mxu0 %v214
    %349 = vmatprep.subr.mxu0 %v213
    %350 = vmatpush2.msra.mxu0 %v212
    %351 = vmatprep.subr.mxu0 %v211
    %352 = vmatpush2.msra.mxu0 %v210
    %353 = vmatprep.subr.mxu0 %v209
    %354 = vmatpush2.msra.mxu0 %v208
    %355 = vmatprep.subr.mxu0 %v207
    %356 = vmatpush2.msra.mxu0 %v206
    %357 = vmatprep.subr.mxu0 %v205
    %358 = vmatpush2.msra.mxu0 %v204
    %359 = vmatprep.subr.mxu0 %v203
    %360 = vmatpush2.msra.mxu0 %v202
    %361 = vmatprep.subr.mxu0 %v201
    %362 = vmatpush2.msra.mxu0 %v200
    %363 = vmatprep.subr.mxu0 %v199
    %364 = vmatpush2.msra.mxu0 %v198
    %365 = vmatprep.subr.mxu0 %v197
    %366 = vmatpush2.msra.mxu0 %v196
    %367 = vmatprep.subr.mxu0 %v195
    %368 = vmatpush2.msra.mxu0 %v194
    %369 = vmatprep.subr.mxu0 %v193
    %370 = vmatpush2.msra.mxu0 %v192
    %371 = vmatprep.mubr.f32.mxu0 %v95
    %372 = vmatmul.mubr.f32.gmra.mxu0 %v94
    %v373 = vpop.f32.mrf.mxu0
    %v374 = vadd.f32 %v303, %v373
    %v375 = vpop.f32.mrf.mxu0
    %v376 = vadd.f32 %v305, %v375
    %377 = vdwg.mxu0
    %378 = vst [vmem:[%s5] sm:$0xff] %v374
    %379 = vst [vmem:[%s5 + $0x8] sm:$0xff] %v376
    %v380 = vrot.slane %v374, 4
    %v381 = vadd.f32 %v374, %v380
    %v382 = vrot.slane %v381, 2
    %v383 = vadd.f32 %v381, %v382
    %v384 = vrot.slane %v383, 1
    %v385 = vadd.f32 %v383, %v384
    %v386 = vrot.slane %v376, 4
    %v387 = vadd.f32 %v376, %v386
    %v388 = vrot.slane %v387, 2
    %v389 = vadd.f32 %v387, %v388
    %v390 = vrot.slane %v389, 1
    %v391 = vadd.f32 %v389, %v390
    %v394 = vcombine.low %v385, %v391
    %v396 = vunpack.c.l.s4 1966171168
    %v397 = vunpack.c.0.s8 %v396
    %v398 = vlaneseq
    %v399 = vshrl.u32 %v398, 7
    %v400 = vsub.s32 %v397, %v399
    %v401 = vrot.slane %v394, %v400
    %v403 = vunpack.c.l.s4 1966171168
    %v404 = vunpack.c.0.s8 %v403
    %v405 = vlaneseq
    %v406 = vshrl.u32 %v405, 7
    %v407 = vsub.s32 %v404, %v406
    %v408 = vrot.slane %v401, %v407
    %v410 = vlaneseq
    %vm411 = vcmp.ge.s32.totalorder %v410, 0
    %vm412 = vcmp.lt.s32.totalorder %v410, 256
    %vm413 = vmand %vm411, %vm412
    %414 = vst.msk [vmem:[%s6] ss:$8 sm:$0x3] %vm413, %v408
    %415 = vst.msk [vmem:[%s6] ss:$8 sm:$0x0] %vm413, %v408
    %v416 = vmul.f32 %v374, %v374
    %v417 = vmul.f32 %v376, %v376
    %v418 = vrot.slane %v416, 4
    %v419 = vadd.f32 %v416, %v418
    %v420 = vrot.slane %v419, 2
    %v421 = vadd.f32 %v419, %v420
    %v422 = vrot.slane %v421, 1
    %v423 = vadd.f32 %v421, %v422
    %v424 = vrot.slane %v417, 4
    %v425 = vadd.f32 %v417, %v424
    %v426 = vrot.slane %v425, 2
    %v427 = vadd.f32 %v425, %v426
    %v428 = vrot.slane %v427, 1
    %v429 = vadd.f32 %v427, %v428
    %v432 = vcombine.low %v423, %v429
    %v434 = vunpack.c.l.s4 1966171168
    %v435 = vunpack.c.0.s8 %v434
    %v436 = vlaneseq
    %v437 = vshrl.u32 %v436, 7
    %v438 = vsub.s32 %v435, %v437
    %v439 = vrot.slane %v432, %v438
    %v441 = vunpack.c.l.s4 1966171168
    %v442 = vunpack.c.0.s8 %v441
    %v443 = vlaneseq
    %v444 = vshrl.u32 %v443, 7
    %v445 = vsub.s32 %v442, %v444
    %v446 = vrot.slane %v439, %v445
    %s448 = scalar_lea.vmem %s6, 1
    %449 = vst.msk [vmem:[%s448] ss:$8 sm:$0x3] %vm413, %v446
    %450 = vst.msk [vmem:[%s448] ss:$8 sm:$0x0] %vm413, %v446
    // Predicated region
    $region26: #{regressor_forward.5} parent=1 // pred_check
      _
    $region27: #{regressor_forward.5} parent=1 // pred_check_branch
      %452 = sbr.rel (0) target = $region29
    $region28: #{regressor_forward.5} parent=1 // pred_region
      _
    $region29: #{regressor_forward.5} parent=1 // pred_fallthru
      _
    // Predicated region
    $region30: #{regressor_forward.5} parent=1 // pred_check
      _
    $region31: #{regressor_forward.5} parent=1 // pred_check_branch
      %454 = sbr.rel (0) target = $region33
    $region32: #{regressor_forward.5} parent=1 // pred_region
      _
    $region33: #{regressor_forward.5} parent=1 // pred_fallthru
      _
    // Predicated region
    $region34: #{regressor_forward.5} parent=1 // pred_check
      _
    $region35: #{regressor_forward.5} parent=1 // pred_check_branch
      %456 = sbr.rel (0) target = $region37
    $region36: #{regressor_forward.5} parent=1 // pred_region
      _
    $region37: #{regressor_forward.5} parent=1 // pred_fallthru
      _
    // Predicated region
    $region38: #{regressor_forward.5} parent=1 // pred_check
      _
    $region39: #{regressor_forward.5} parent=1 // pred_check_branch
      %458 = sbr.rel (0) target = $region41
    $region40: #{regressor_forward.5} parent=1 // pred_region
      _
    $region41: #{regressor_forward.5} parent=1 // pred_fallthru
      _
    %459 = vsyncpa [#allocation3], 1

// kernel: regressor_forward.7
$region0: #{regressor_forward.7}
  #allocation0 [shape = 'u32[]', space=smem, size = 0x4, offset = 0x4, fixed_abs, tag = 'smem constant byte address 0x4 - core index']
  #allocation1 [shape = 'u32[144,128]{1,0:T(1,128)}', space=vmem, size = 0x12000, scoped, tag = 'internal scratch']
  %s0 = inlined_call_operand.vmem [shape: f32[8,128], index: 0, kind: input, shape index: {}]
  %s1 = inlined_call_operand.vmem [shape: f32[1,128], index: 1, kind: input, shape index: {}]
  %s2 = inlined_call_operand.vmem [shape: f32[1,128], index: 2, kind: input, shape index: {}]
  %s3 = inlined_call_operand.vmem [shape: f32[128,128], index: 3, kind: input, shape index: {}]
  %s4 = inlined_call_operand.vmem [shape: f32[1,128], index: 4, kind: input, shape index: {}]
  %s5 = inlined_call_operand.vmem [shape: f32[8,128], index: 5, kind: output, shape index: {}]
  %s6 = sld [smem:[#allocation0]]
  $region30: #{regressor_forward.7} parent=0
    _
  %s8 = ssub.s32 1, %s6
  %s9 = scalar_select 0, %s8, %s6
  // Predicated region
  $region2: #{regressor_forward.7} parent=0 // pred_check
    _
  $region3: #{regressor_forward.7} parent=0 // pred_check_branch
    %11 = sbr.rel (0) target = $region5
  $region4: #{regressor_forward.7} parent=0 // pred_region
    _
  $region5: #{regressor_forward.7} parent=0 // pred_fallthru
    _
  // Predicated region
  $region6: #{regressor_forward.7} parent=0 // pred_check
    _
  $region7: #{regressor_forward.7} parent=0 // pred_check_branch
    %13 = sbr.rel (0) target = $region9
  $region8: #{regressor_forward.7} parent=0 // pred_region
    _
  $region9: #{regressor_forward.7} parent=0 // pred_fallthru
    _
  // Predicated region
  $region10: #{regressor_forward.7} parent=0 // pred_check
    _
  $region11: #{regressor_forward.7} parent=0 // pred_check_branch
    %15 = sbr.rel (0) target = $region13
  $region12: #{regressor_forward.7} parent=0 // pred_region
    _
  $region13: #{regressor_forward.7} parent=0 // pred_fallthru
    _
  // Predicated region
  $region14: #{regressor_forward.7} parent=0 // pred_check
    _
  $region15: #{regressor_forward.7} parent=0 // pred_check_branch
    %17 = sbr.rel (0) target = $region17
  $region16: #{regressor_forward.7} parent=0 // pred_region
    _
  $region17: #{regressor_forward.7} parent=0 // pred_fallthru
    _
  // Predicated region
  $region18: #{regressor_forward.7} parent=0 // pred_check
    _
  $region19: #{regressor_forward.7} parent=0 // pred_check_branch
    %19 = sbr.rel (0) target = $region21
  $region20: #{regressor_forward.7} parent=0 // pred_region
    _
  $region21: #{regressor_forward.7} parent=0 // pred_fallthru
    _
  %v20 = vld [vmem:[%s0] sm:$0xff]
  %v21 = vld [vmem:[%s1] sm:$0x1]
  %v23 = vlaneseq
  %v24 = vshrl.u32 %v23, 7
  %v25 = vsub.s32 0, %v24
  %v26 = vrot.slane %v21, %v25
  %v28 = vmul.f32 %v20, %v26
  %v29 = vld [vmem:[%s2] sm:$0x1]
  %v31 = vlaneseq
  %v32 = vshrl.u32 %v31, 7
  %v33 = vsub.s32 0, %v32
  %v34 = vrot.slane %v29, %v33
  %v36 = vadd.f32 %v28, %v34
  %v37 = vmax.f32 %v36, 0.0
  %v38 = vld [vmem:[%s3] sm:$0xff]
  %v39 = vld [vmem:[%s3 + $0x8] sm:$0xff]
  %v40 = vld [vmem:[%s3 + $0x10] sm:$0xff]
  %v41 = vld [vmem:[%s3 + $0x18] sm:$0xff]
  %v42 = vld [vmem:[%s3 + $0x20] sm:$0xff]
  %v43 = vld [vmem:[%s3 + $0x28] sm:$0xff]
  %v44 = vld [vmem:[%s3 + $0x30] sm:$0xff]
  %v45 = vld [vmem:[%s3 + $0x38] sm:$0xff]
  %v46 = vld [vmem:[%s3 + $0x40] sm:$0xff]
  %v47 = vld [vmem:[%s3 + $0x48] sm:$0xff]
  %v48 = vld [vmem:[%s3 + $0x50] sm:$0xff]
  %v49 = vld [vmem:[%s3 + $0x58] sm:$0xff]
  %v50 = vld [vmem:[%s3 + $0x60] sm:$0xff]
  %v51 = vld [vmem:[%s3 + $0x68] sm:$0xff]
  %v52 = vld [vmem:[%s3 + $0x70] sm:$0xff]
  %v53 = vld [vmem:[%s3 + $0x78] sm:$0xff]
  %v54 = vld [vmem:[%s4] sm:$0x1]
  %v56 = vlaneseq
  %v57 = vshrl.u32 %v56, 7
  %v58 = vsub.s32 0, %v57
  %v59 = vrot.slane %v54, %v58
  %61 = vmatprep.subr.mxu0 0.0
  %62 = vmatpush1.msra.mxu0 %v53
  %63 = vmatprep.subr.mxu0 0.0
  %64 = vmatpush1.msra.mxu0 %v52
  %65 = vmatprep.subr.mxu0 0.0
  %66 = vmatpush1.msra.mxu0 %v51
  %67 = vmatprep.subr.mxu0 0.0
  %68 = vmatpush1.msra.mxu0 %v50
  %69 = vmatprep.subr.mxu0 0.0
  %70 = vmatpush1.msra.mxu0 %v49
  %71 = vmatprep.subr.mxu0 0.0
  %72 = vmatpush1.msra.mxu0 %v48
  %73 = vmatprep.subr.mxu0 0.0
  %74 = vmatpush1.msra.mxu0 %v47
  %75 = vmatprep.subr.mxu0 0.0
  %76 = vmatpush1.msra.mxu0 %v46
  %77 = vmatprep.subr.mxu0 0.0
  %78 = vmatpush1.msra.mxu0 %v45
  %79 = vmatprep.subr.mxu0 0.0
  %80 = vmatpush1.msra.mxu0 %v44
  %81 = vmatprep.subr.mxu0 0.0
  %82 = vmatpush1.msra.mxu0 %v43
  %83 = vmatprep.subr.mxu0 0.0
  %84 = vmatpush1.msra.mxu0 %v42
  %85 = vmatprep.subr.mxu0 0.0
  %86 = vmatpush1.msra.mxu0 %v41
  %87 = vmatprep.subr.mxu0 0.0
  %88 = vmatpush1.msra.mxu0 %v40
  %89 = vmatprep.subr.mxu0 0.0
  %90 = vmatpush1.msra.mxu0 %v39
  %91 = vmatprep.subr.mxu0 0.0
  %92 = vmatpush1.msra.mxu0 %v38
  %93 = vmatprep.subr.mxu0 0.0
  %94 = vmatpush2.msra.mxu0 0.0
  %95 = vmatprep.subr.mxu0 0.0
  %96 = vmatpush2.msra.mxu0 0.0
  %97 = vmatprep.subr.mxu0 0.0
  %98 = vmatpush2.msra.mxu0 0.0
  %99 = vmatprep.subr.mxu0 0.0
  %100 = vmatpush2.msra.mxu0 0.0
  %101 = vmatprep.subr.mxu0 0.0
  %102 = vmatpush2.msra.mxu0 0.0
  %103 = vmatprep.subr.mxu0 0.0
  %104 = vmatpush2.msra.mxu0 0.0
  %105 = vmatprep.subr.mxu0 0.0
  %106 = vmatpush2.msra.mxu0 0.0
  %107 = vmatprep.subr.mxu0 0.0
  %108 = vmatpush2.msra.mxu0 0.0
  %109 = vmatprep.subr.mxu0 0.0
  %110 = vmatpush2.msra.mxu0 0.0
  %111 = vmatprep.subr.mxu0 0.0
  %112 = vmatpush2.msra.mxu0 0.0
  %113 = vmatprep.subr.mxu0 0.0
  %114 = vmatpush2.msra.mxu0 0.0
  %115 = vmatprep.subr.mxu0 0.0
  %116 = vmatpush2.msra.mxu0 0.0
  %117 = vmatprep.subr.mxu0 0.0
  %118 = vmatpush2.msra.mxu0 0.0
  %119 = vmatprep.subr.mxu0 0.0
  %120 = vmatpush2.msra.mxu0 0.0
  %121 = vmatprep.subr.mxu0 0.0
  %122 = vmatpush2.msra.mxu0 0.0
  %123 = vmatprep.subr.mxu0 0.0
  %124 = vmatpush2.msra.mxu0 0.0
  %125 = vmatprep.mubr.f32.mxu0 0.0
  %126 = vmatmul.mubr.f32.gmra.mxu0 %v37
  %v127 = vpop.f32.mrf.mxu0
  %v128 = vadd.f32 %v59, %v127
  %v129 = vpop.f32.mrf.mxu0
  %130 = vdwg.mxu0
  %v131 = vmul.f32 %v128, 0.5
  %v132 = vtanh.pop %v131
  %v133 = vmul.f32 %v132, 0.5
  %v134 = vadd.f32 %v133, 0.5
  %135 = vst [vmem:[%s5] sm:$0xff] %v134
  // Predicated region
  $region22: #{regressor_forward.7} parent=0 // pred_check
    _
  $region23: #{regressor_forward.7} parent=0 // pred_check_branch
    %137 = sbr.rel (0) target = $region25
  $region24: #{regressor_forward.7} parent=0 // pred_region
    _
  $region25: #{regressor_forward.7} parent=0 // pred_fallthru
    _
  // Predicated region
  $region26: #{regressor_forward.7} parent=0 // pred_check
    _
  $region27: #{regressor_forward.7} parent=0 // pred_check_branch
    %139 = sbr.rel (0) target = $region29
  $region28: #{regressor_forward.7} parent=0 // pred_region
    _
  $region29: #{regressor_forward.7} parent=0 // pred_fallthru
    _

</llo_original>
